<compile_context>
chip_gen: v7x
topology: tpu7x:2x2x1
jax: 0.10.0
libtpu: 0.0.40
codegen_flags: <defaults>
</compile_context>

<pallas_src>
import functools

import jax
import jax.numpy as jnp
from jax.experimental import pallas as pl
from jax.experimental.pallas import tpu as pltpu

D_IN, D_HID, D_OUT = 900, 300, 1
D_IN_PAD, D_HID_PAD = 1024, 384      # 128-multiples -> lane-dense DMA / MXU tiles
MAX_BATCH_TILE = 512                 # biggest batch tile that fits all generations


def _round_up(n, m):
    return (n + m - 1) // m * m


def mlp_kernel(x_ref, w0_ref, b0_ref, w1_ref, b1_ref, w3_ref, b3_ref, o_ref):
    # Layer 0: (TB,1024)bf16 @ (1024,384)bf16 -> f32 accumulate, sigmoid in f32.
    h0 = jnp.dot(x_ref[...], w0_ref[...], preferred_element_type=jnp.float32)
    h0 = jax.nn.sigmoid(h0 + b0_ref[...])
    # Layer 1: (TB,384)bf16 @ (384,384)bf16 -> f32 accumulate.
    h1 = jnp.dot(h0.astype(jnp.bfloat16), w1_ref[...],
                 preferred_element_type=jnp.float32)
    h1 = jax.nn.sigmoid(h1 + b1_ref[...])
    # Layer 3 (out_features == 1): cross-lane reduce on the VPU/XLU instead of a
    # degenerate N=1 MXU matmul; bias is a scalar read from SMEM.
    z = jnp.sum(h1 * w3_ref[...].astype(jnp.float32), axis=-1, keepdims=True)
    o_ref[...] = jax.nn.sigmoid(z + b3_ref[0, 0]).astype(o_ref.dtype)


def init_params(key):
    """PyTorch-style init: U(-1/sqrt(fan_in), 1/sqrt(fan_in)).
    Weights stored transposed vs. PyTorch, i.e. shape (in_features, out_features)."""
    dims = [(D_IN, D_HID), (D_HID, D_HID), (D_HID, D_OUT)]
    names = ["0", "1", "3"]
    params = {}
    for (fan_in, fan_out), name in zip(dims, names):
        key, kw, kb = jax.random.split(key, 3)
        bound = 1.0 / jnp.sqrt(jnp.float32(fan_in))
        params[f"w{name}"] = jax.random.uniform(
            kw, (fan_in, fan_out), jnp.float32, -bound, bound)
        params[f"b{name}"] = jax.random.uniform(
            kb, (fan_out,), jnp.float32, -bound, bound)
    return params


def pack_params(params):
    """Zero-pad feature dims to 128-multiples and cast weights to bf16."""
    w0 = jnp.zeros((D_IN_PAD, D_HID_PAD), jnp.float32).at[:D_IN, :D_HID].set(params["w0"])
    w1 = jnp.zeros((D_HID_PAD, D_HID_PAD), jnp.float32).at[:D_HID, :D_HID].set(params["w1"])
    w3 = jnp.zeros((1, D_HID_PAD), jnp.float32).at[0, :D_HID].set(params["w3"][:, 0])
    b0 = jnp.zeros((1, D_HID_PAD), jnp.float32).at[0, :D_HID].set(params["b0"])
    b1 = jnp.zeros((1, D_HID_PAD), jnp.float32).at[0, :D_HID].set(params["b1"])
    b3 = params["b3"].reshape(1, 1).astype(jnp.float32)
    return dict(w0=w0.astype(jnp.bfloat16), w1=w1.astype(jnp.bfloat16),
                w3=w3.astype(jnp.bfloat16), b0=b0, b1=b1, b3=b3)


@functools.partial(jax.jit, static_argnames=("batch_tile",))
def mlp_forward(x, packed, batch_tile=MAX_BATCH_TILE):
    """x: (B, 900) float32; packed: output of pack_params. Returns (B, 1) f32."""
    B = x.shape[0]
    tb = min(batch_tile, _round_up(B, 8))
    b_pad = _round_up(B, tb)
    n_tiles = b_pad // tb

    # Pad batch and features with zeros; cast activations to bf16 for the MXU.
    xp = jnp.zeros((b_pad, D_IN_PAD), jnp.bfloat16)
    xp = xp.at[:B, :D_IN].set(x.astype(jnp.bfloat16))

    # Weights/biases: constant block index -> DMA'd once, resident across tiles.
    const = lambda a: pl.BlockSpec(a.shape, lambda i: (0,) * a.ndim)

    out = pl.pallas_call(
        mlp_kernel,
        out_shape=jax.ShapeDtypeStruct((b_pad, 1), jnp.float32),
        grid=(n_tiles,),
        in_specs=[
            pl.BlockSpec((tb, D_IN_PAD), lambda i: (i, 0)),      # x: tiled on batch
            const(packed["w0"]), const(packed["b0"]),
            const(packed["w1"]), const(packed["b1"]),
            const(packed["w3"]),
            pl.BlockSpec(memory_space=pltpu.MemorySpace.SMEM),   # b3 scalar in SMEM
        ],
        out_specs=pl.BlockSpec((tb, 1), lambda i: (i, 0)),
        compiler_params=pltpu.CompilerParams(
            dimension_semantics=("parallel",)),                  # megacore on v7x
    )(xp, packed["w0"], packed["b0"], packed["w1"], packed["b1"],
      packed["w3"], packed["b3"])
    return out[:B]


def reference_forward_f32(x, params):
    """Exact f32 semantics of the PyTorch module (weights already (in,out))."""
    h = jax.nn.sigmoid(x @ params["w0"] + params["b0"])
    h = jax.nn.sigmoid(h @ params["w1"] + params["b1"])
    return jax.nn.sigmoid(h @ params["w3"] + params["b3"])


def reference_forward_packed(x, packed):
    """Same numerics as the kernel (bf16 matmul inputs, f32 accumulation)."""
    B = x.shape[0]
    xp = jnp.zeros((B, D_IN_PAD), jnp.float32).at[:, :D_IN].set(x).astype(jnp.bfloat16)
    h = jnp.dot(xp, packed["w0"], preferred_element_type=jnp.float32) + packed["b0"]
    h = jax.nn.sigmoid(h)
    h = jnp.dot(h.astype(jnp.bfloat16), packed["w1"],
                preferred_element_type=jnp.float32) + packed["b1"]
    h = jax.nn.sigmoid(h)
    z = jnp.sum(h * packed["w3"].astype(jnp.float32), axis=-1, keepdims=True)
    return jax.nn.sigmoid(z + packed["b3"][0, 0])


if __name__ == "__main__":
    key = jax.random.PRNGKey(0)
    key, kx = jax.random.split(key)
    batch = 8
    x = jax.random.normal(kx, (batch, D_IN), jnp.float32)

    params = init_params(key)
    packed = pack_params(params)

    out = mlp_forward(x, packed)
    jax.block_until_ready(out)
    assert out.shape == (batch, 1)

    ref_same_numerics = reference_forward_packed(x, packed)   # same bf16 rounding
    ref_module_f32 = reference_forward_f32(x, params)         # module's f32 math
    assert jnp.allclose(out, ref_same_numerics, atol=2e-3, rtol=2e-3)
    assert jnp.allclose(out, ref_module_f32, atol=2e-2, rtol=2e-2)
    print("KERNEL_OK")
</pallas_src>

<mosaic_0001>
module attributes {stable_mosaic.version = 11 : i64} {
  func.func @mlp_kernel(%arg0: i32, %arg1: memref<8x1024xbf16, #tpu.memory_space<vmem>>, %arg2: memref<1024x384xbf16, #tpu.memory_space<vmem>>, %arg3: memref<1x384xf32, #tpu.memory_space<vmem>>, %arg4: memref<384x384xbf16, #tpu.memory_space<vmem>>, %arg5: memref<1x384xf32, #tpu.memory_space<vmem>>, %arg6: memref<1x384xbf16, #tpu.memory_space<vmem>>, %arg7: memref<1x1xf32, #tpu.memory_space<smem>>, %arg8: memref<8x1xf32, #tpu.memory_space<vmem>>) attributes {dimension_semantics = [#tpu.dimension_semantics<parallel>], iteration_bounds = array<i64: 1>, scalar_prefetch = 0 : i64, scratch_operands = 0 : i64, tpu.core_type = #tpu.core_type<tc>, window_params = [{transform_indices = @transform_0, window_bounds = array<i64: 8, 1024>}, {pipeline_mode = #tpu.pipeline_mode<synchronous>, transform_indices = @transform_1, window_bounds = array<i64: 1024, 384>}, {pipeline_mode = #tpu.pipeline_mode<synchronous>, transform_indices = @transform_2, window_bounds = array<i64: 1, 384>}, {pipeline_mode = #tpu.pipeline_mode<synchronous>, transform_indices = @transform_3, window_bounds = array<i64: 384, 384>}, {pipeline_mode = #tpu.pipeline_mode<synchronous>, transform_indices = @transform_4, window_bounds = array<i64: 1, 384>}, {pipeline_mode = #tpu.pipeline_mode<synchronous>, transform_indices = @transform_5, window_bounds = array<i64: 1, 384>}, {transform_indices = @transform_6, window_bounds = array<i64: 1, 1>}, {transform_indices = @transform_7, window_bounds = array<i64: 8, 1>}]} {
    %c0 = arith.constant 0 : index
    %c0_0 = arith.constant 0 : index
    %0 = vector.load %arg1[%c0, %c0_0] : memref<8x1024xbf16, #tpu.memory_space<vmem>>, vector<8x1024xbf16>
    %c0_1 = arith.constant 0 : index
    %c0_2 = arith.constant 0 : index
    %1 = vector.load %arg2[%c0_1, %c0_2] : memref<1024x384xbf16, #tpu.memory_space<vmem>>, vector<1024x384xbf16>
    %cst = arith.constant dense<0.000000e+00> : vector<8x384xf32>
    %2 = tpu.matmul %0, %1, %cst {dimension_numbers = #tpu.dot_dimension_numbers<[1], [0], [0], [1], [0, 0, 1, 1], [], []>} : vector<8x1024xbf16>, vector<1024x384xbf16>, vector<8x384xf32> -> vector<8x384xf32>
    %c0_3 = arith.constant 0 : index
    %c0_4 = arith.constant 0 : index
    %3 = vector.load %arg3[%c0_3, %c0_4] : memref<1x384xf32, #tpu.memory_space<vmem>>, vector<1x384xf32>
    %4 = vector.broadcast %3 : vector<1x384xf32> to vector<8x384xf32>
    %5 = arith.addf %2, %4 : vector<8x384xf32>
    %6 = arith.negf %5 : vector<8x384xf32>
    %7 = math.exp %6 : vector<8x384xf32>
    %cst_5 = arith.constant 1.000000e+00 : f32
    %8 = vector.broadcast %cst_5 : f32 to vector<8x384xf32>
    %9 = arith.addf %8, %7 : vector<8x384xf32>
    %10 = arith.divf %8, %9 : vector<8x384xf32>
    %11 = arith.truncf %10 : vector<8x384xf32> to vector<8x384xbf16>
    %c0_6 = arith.constant 0 : index
    %c0_7 = arith.constant 0 : index
    %12 = vector.load %arg4[%c0_6, %c0_7] : memref<384x384xbf16, #tpu.memory_space<vmem>>, vector<384x384xbf16>
    %cst_8 = arith.constant dense<0.000000e+00> : vector<8x384xf32>
    %13 = tpu.matmul %11, %12, %cst_8 {dimension_numbers = #tpu.dot_dimension_numbers<[1], [0], [0], [1], [0, 0, 1, 1], [], []>} : vector<8x384xbf16>, vector<384x384xbf16>, vector<8x384xf32> -> vector<8x384xf32>
    %c0_9 = arith.constant 0 : index
    %c0_10 = arith.constant 0 : index
    %14 = vector.load %arg5[%c0_9, %c0_10] : memref<1x384xf32, #tpu.memory_space<vmem>>, vector<1x384xf32>
    %15 = vector.broadcast %14 : vector<1x384xf32> to vector<8x384xf32>
    %16 = arith.addf %13, %15 : vector<8x384xf32>
    %17 = arith.negf %16 : vector<8x384xf32>
    %18 = math.exp %17 : vector<8x384xf32>
    %cst_11 = arith.constant 1.000000e+00 : f32
    %19 = vector.broadcast %cst_11 : f32 to vector<8x384xf32>
    %20 = arith.addf %19, %18 : vector<8x384xf32>
    %21 = arith.divf %19, %20 : vector<8x384xf32>
    %c0_12 = arith.constant 0 : index
    %c0_13 = arith.constant 0 : index
    %22 = vector.load %arg6[%c0_12, %c0_13] : memref<1x384xbf16, #tpu.memory_space<vmem>>, vector<1x384xbf16>
    %23 = arith.extf %22 : vector<1x384xbf16> to vector<1x384xf32>
    %24 = vector.broadcast %23 : vector<1x384xf32> to vector<8x384xf32>
    %25 = arith.mulf %21, %24 : vector<8x384xf32>
    %cst_14 = arith.constant dense<0.000000e+00> : vector<8xf32>
    %26 = vector.multi_reduction <add>, %25, %cst_14 [1] : vector<8x384xf32> to vector<8xf32>
    %27 = vector.shape_cast %26 : vector<8xf32> to vector<8x1xf32>
    %c0_15 = arith.constant 0 : index
    %c0_16 = arith.constant 0 : index
    %28 = memref.load %arg7[%c0_15, %c0_16] : memref<1x1xf32, #tpu.memory_space<smem>>
    %29 = vector.broadcast %28 : f32 to vector<8x1xf32>
    %30 = arith.addf %27, %29 : vector<8x1xf32>
    %31 = arith.negf %30 : vector<8x1xf32>
    %32 = math.exp %31 : vector<8x1xf32>
    %cst_17 = arith.constant 1.000000e+00 : f32
    %33 = vector.broadcast %cst_17 : f32 to vector<8x1xf32>
    %34 = arith.addf %33, %32 : vector<8x1xf32>
    %35 = arith.divf %33, %34 : vector<8x1xf32>
    %c0_18 = arith.constant 0 : index
    %c0_19 = arith.constant 0 : index
    %36 = vector.load %arg8[%c0_18, %c0_19] : memref<8x1xf32, #tpu.memory_space<vmem>>, vector<8x1xf32>
    tpu.vector_store %arg8[%c0_18, %c0_19], %35 {strides = array<i32>} : memref<8x1xf32, #tpu.memory_space<vmem>>, vector<8x1xf32>,
    return
  }
  func.func @transform_0(%arg0: i32) -> (i32, i32) {
    %c0_i32 = arith.constant 0 : i32
    %c0_i32_0 = arith.constant 0 : i32
    return %arg0, %c0_i32 : i32, i32
  }
  func.func @transform_1(%arg0: i32) -> (i32, i32) {
    %c0_i32 = arith.constant 0 : i32
    %c0_i32_0 = arith.constant 0 : i32
    %c0_i32_1 = arith.constant 0 : i32
    return %c0_i32, %c0_i32_0 : i32, i32
  }
  func.func @transform_2(%arg0: i32) -> (i32, i32) {
    %c0_i32 = arith.constant 0 : i32
    %c0_i32_0 = arith.constant 0 : i32
    %c0_i32_1 = arith.constant 0 : i32
    return %c0_i32, %c0_i32_0 : i32, i32
  }
  func.func @transform_3(%arg0: i32) -> (i32, i32) {
    %c0_i32 = arith.constant 0 : i32
    %c0_i32_0 = arith.constant 0 : i32
    %c0_i32_1 = arith.constant 0 : i32
    return %c0_i32, %c0_i32_0 : i32, i32
  }
  func.func @transform_4(%arg0: i32) -> (i32, i32) {
    %c0_i32 = arith.constant 0 : i32
    %c0_i32_0 = arith.constant 0 : i32
    %c0_i32_1 = arith.constant 0 : i32
    return %c0_i32, %c0_i32_0 : i32, i32
  }
  func.func @transform_5(%arg0: i32) -> (i32, i32) {
    %c0_i32 = arith.constant 0 : i32
    %c0_i32_0 = arith.constant 0 : i32
    %c0_i32_1 = arith.constant 0 : i32
    return %c0_i32, %c0_i32_0 : i32, i32
  }
  func.func @transform_6(%arg0: i32) -> (i32, i32) {
    %c0_i32 = arith.constant 0 : i32
    %c0_i32_0 = arith.constant 0 : i32
    %c0_i32_1 = arith.constant 0 : i32
    return %c0_i32, %c0_i32_0 : i32, i32
  }
  func.func @transform_7(%arg0: i32) -> (i32, i32) {
    %c0_i32 = arith.constant 0 : i32
    %c0_i32_0 = arith.constant 0 : i32
    return %arg0, %c0_i32 : i32, i32
  }
}

</mosaic_0001>

<llo_original>
// kernel: mlp_forward.1
$region0: #{mlp_forward.1}
  #allocation0 [shape = 'u32[]', space=smem, size = 0x4, offset = 0x4, fixed_abs, tag = 'smem constant byte address 0x4 - core index']
  #allocation1 [shape = 'u32[144,128]{1,0:T(1,128)}', space=vmem, size = 0x12000, scoped, tag = 'internal scratch']
  #allocation2 [shape = 'f32[1,1]{1,0:T(1,128)S(6)}', space=smem, size = 0x200, scoped, tag = 'scoped memory for mlp_forward.1']
  %s0 = inlined_call_operand.vmem [shape: bf16[8,1024], index: 0, kind: input, shape index: {}]
  %s1 = inlined_call_operand.hbm [shape: bf16[1024,384], index: 1, kind: input, shape index: {}]
  %s2 = inlined_call_operand.vmem [shape: f32[1,384], index: 2, kind: input, shape index: {}]
  %s3 = inlined_call_operand.hbm [shape: bf16[384,384], index: 3, kind: input, shape index: {}]
  %s4 = inlined_call_operand.vmem [shape: f32[1,384], index: 4, kind: input, shape index: {}]
  %s5 = inlined_call_operand.vmem [shape: bf16[1,384], index: 5, kind: input, shape index: {}]
  %s6 = inlined_call_operand.<no memory space> [shape: f32[1,1], index: 6, kind: input, shape index: {}]
  %s7 = inlined_call_operand.vmem [shape: f32[8,1], index: 7, kind: output, shape index: {}]
  %s8 = sld [smem:[#allocation0]]
  $region46: #{mlp_forward.1} parent=0
    _
  %s10 = ssub.s32 1, %s8
  %s11 = scalar_select 0, %s10, %s8
  %12 = sst [smem:[#allocation2]] %s6
  $region1: #{mlp_forward.1} parent=0
    #allocation3 [shape = 'u8[786432]{0}', space=vmem, size = 0xc0000, scoped, tag = 'input window, operand 1, single buffered']
    #allocation4 [shape = 's32[1]{0}', space=sflag, size = 0x4, scoped, tag = 'scoped memory for mlp_forward.1']
    #allocation5 [shape = 'u8[294912]{0}', space=vmem, size = 0x48000, scoped, tag = 'input window, operand 3, single buffered']
    #allocation6 [shape = 's32[1]{0}', space=sflag, size = 0x4, scoped, tag = 'scoped memory for mlp_forward.1']
    %13 = vsyncpa [#allocation4], 0
    %14 = vsyncpa [#allocation6], 0
    // Predicated region
    $region2: #{mlp_forward.1} parent=1 // pred_check
      _
    $region3: #{mlp_forward.1} parent=1 // pred_check_branch
      %16 = sbr.rel (0) target = $region5
    $region4: #{mlp_forward.1} parent=1 // pred_region
      _
    $region5: #{mlp_forward.1} parent=1 // pred_fallthru
      _
    // Predicated region
    $region6: #{mlp_forward.1} parent=1 // pred_check
      _
    $region7: #{mlp_forward.1} parent=1 // pred_check_branch
      %18 = sbr.rel (0) target = $region9
    $region8: #{mlp_forward.1} parent=1 // pred_region
      %s20 = ssub.s32 24576, 24576
      %21 = vsyncadd [#allocation4], %s20
      %s22 = sshll.u32 [#allocation3], 4
      %s23 = int_to_ptr.vmem [resolvable:$true] %s22
      %28 = dma.hbm_to_vmem [thread:$0]  %s1, 24576, %s23, [#allocation4], 192, 192, 12
    $region9: #{mlp_forward.1} parent=1 // pred_fallthru
      _
    // Predicated region
    $region10: #{mlp_forward.1} parent=1 // pred_check
      _
    $region11: #{mlp_forward.1} parent=1 // pred_check_branch
      %30 = sbr.rel (0) target = $region13
    $region12: #{mlp_forward.1} parent=1 // pred_region
      _
    $region13: #{mlp_forward.1} parent=1 // pred_fallthru
      _
    // Predicated region
    $region14: #{mlp_forward.1} parent=1 // pred_check
      _
    $region15: #{mlp_forward.1} parent=1 // pred_check_branch
      %32 = sbr.rel (0) target = $region17
    $region16: #{mlp_forward.1} parent=1 // pred_region
      %s34 = ssub.s32 9216, 9216
      %35 = vsyncadd [#allocation6], %s34
      %s36 = sshll.u32 [#allocation5], 4
      %s37 = int_to_ptr.vmem [resolvable:$true] %s36
      %42 = dma.hbm_to_vmem [thread:$0]  %s3, 9216, %s37, [#allocation6], 192, 192, 12
    $region17: #{mlp_forward.1} parent=1 // pred_fallthru
      _
    // Predicated region
    $region18: #{mlp_forward.1} parent=1 // pred_check
      _
    $region19: #{mlp_forward.1} parent=1 // pred_check_branch
      %44 = sbr.rel (0) target = $region21
    $region20: #{mlp_forward.1} parent=1 // pred_region
      _
    $region21: #{mlp_forward.1} parent=1 // pred_fallthru
      _
    // Predicated region
    $region22: #{mlp_forward.1} parent=1 // pred_check
      _
    $region23: #{mlp_forward.1} parent=1 // pred_check_branch
      %46 = sbr.rel (0) target = $region25
    $region24: #{mlp_forward.1} parent=1 // pred_region
      _
    $region25: #{mlp_forward.1} parent=1 // pred_fallthru
      _
    // Predicated region
    $region26: #{mlp_forward.1} parent=1 // pred_check
      _
    $region27: #{mlp_forward.1} parent=1 // pred_check_branch
      %48 = sbr.rel (0) target = $region29
    $region28: #{mlp_forward.1} parent=1 // pred_region
      _
    $region29: #{mlp_forward.1} parent=1 // pred_fallthru
      _
    // Predicated region
    $region30: #{mlp_forward.1} parent=1 // pred_check
      _
    $region31: #{mlp_forward.1} parent=1 // pred_check_branch
      %50 = sbr.rel (0) target = $region33
    $region32: #{mlp_forward.1} parent=1 // pred_region
      %51 = dma.done [#allocation4], 24576
    $region33: #{mlp_forward.1} parent=1 // pred_fallthru
      _
    // Predicated region
    $region34: #{mlp_forward.1} parent=1 // pred_check
      _
    $region35: #{mlp_forward.1} parent=1 // pred_check_branch
      %53 = sbr.rel (0) target = $region37
    $region36: #{mlp_forward.1} parent=1 // pred_region
      %54 = dma.done [#allocation6], 9216
    $region37: #{mlp_forward.1} parent=1 // pred_fallthru
      _
    %v56 = vld [vmem:[%s0] sm:$0xff]
    %v57 = vld [vmem:[%s0 + $0x8] sm:$0xff]
    %v58 = vld [vmem:[%s0 + $0x10] sm:$0xff]
    %v59 = vld [vmem:[%s0 + $0x18] sm:$0xff]
    %v60 = vld [vmem:[#allocation3] sm:$0xff]
    %v61 = vld [vmem:[#allocation3 + $0x8] sm:$0xf]
    %v62 = vld [vmem:[#allocation3 + $0xc] sm:$0xff]
    %v63 = vld [vmem:[#allocation3 + $0x14] sm:$0xf]
    %v64 = vld [vmem:[#allocation3 + $0x18] sm:$0xff]
    %v65 = vld [vmem:[#allocation3 + $0x20] sm:$0xf]
    %v66 = vld [vmem:[#allocation3 + $0x24] sm:$0xff]
    %v67 = vld [vmem:[#allocation3 + $0x2c] sm:$0xf]
    %v68 = vld [vmem:[#allocation3 + $0x30] sm:$0xff]
    %v69 = vld [vmem:[#allocation3 + $0x38] sm:$0xf]
    %v70 = vld [vmem:[#allocation3 + $0x3c] sm:$0xff]
    %v71 = vld [vmem:[#allocation3 + $0x44] sm:$0xf]
    %v72 = vld [vmem:[#allocation3 + $0x48] sm:$0xff]
    %v73 = vld [vmem:[#allocation3 + $0x50] sm:$0xf]
    %v74 = vld [vmem:[#allocation3 + $0x54] sm:$0xff]
    %v75 = vld [vmem:[#allocation3 + $0x5c] sm:$0xf]
    %v76 = vld [vmem:[#allocation3 + $0x60] sm:$0xff]
    %v77 = vld [vmem:[#allocation3 + $0x68] sm:$0xf]
    %v78 = vld [vmem:[#allocation3 + $0x6c] sm:$0xff]
    %v79 = vld [vmem:[#allocation3 + $0x74] sm:$0xf]
    %v80 = vld [vmem:[#allocation3 + $0x78] sm:$0xff]
    %v81 = vld [vmem:[#allocation3 + $0x80] sm:$0xf]
    %v82 = vld [vmem:[#allocation3 + $0x84] sm:$0xff]
    %v83 = vld [vmem:[#allocation3 + $0x8c] sm:$0xf]
    %v84 = vld [vmem:[#allocation3 + $0x90] sm:$0xff]
    %v85 = vld [vmem:[#allocation3 + $0x98] sm:$0xf]
    %v86 = vld [vmem:[#allocation3 + $0x9c] sm:$0xff]
    %v87 = vld [vmem:[#allocation3 + $0xa4] sm:$0xf]
    %v88 = vld [vmem:[#allocation3 + $0xa8] sm:$0xff]
    %v89 = vld [vmem:[#allocation3 + $0xb0] sm:$0xf]
    %v90 = vld [vmem:[#allocation3 + $0xb4] sm:$0xff]
    %v91 = vld [vmem:[#allocation3 + $0xbc] sm:$0xf]
    %v92 = vld [vmem:[#allocation3 + $0xc0] sm:$0xff]
    %v93 = vld [vmem:[#allocation3 + $0xc8] sm:$0xf]
    %v94 = vld [vmem:[#allocation3 + $0xcc] sm:$0xff]
    %v95 = vld [vmem:[#allocation3 + $0xd4] sm:$0xf]
    %v96 = vld [vmem:[#allocation3 + $0xd8] sm:$0xff]
    %v97 = vld [vmem:[#allocation3 + $0xe0] sm:$0xf]
    %v98 = vld [vmem:[#allocation3 + $0xe4] sm:$0xff]
    %v99 = vld [vmem:[#allocation3 + $0xec] sm:$0xf]
    %v100 = vld [vmem:[#allocation3 + $0xf0] sm:$0xff]
    %v101 = vld [vmem:[#allocation3 + $0xf8] sm:$0xf]
    %v102 = vld [vmem:[#allocation3 + $0xfc] sm:$0xff]
    %v103 = vld [vmem:[#allocation3 + $0x104] sm:$0xf]
    %v104 = vld [vmem:[#allocation3 + $0x108] sm:$0xff]
    %v105 = vld [vmem:[#allocation3 + $0x110] sm:$0xf]
    %v106 = vld [vmem:[#allocation3 + $0x114] sm:$0xff]
    %v107 = vld [vmem:[#allocation3 + $0x11c] sm:$0xf]
    %v108 = vld [vmem:[#allocation3 + $0x120] sm:$0xff]
    %v109 = vld [vmem:[#allocation3 + $0x128] sm:$0xf]
    %v110 = vld [vmem:[#allocation3 + $0x12c] sm:$0xff]
    %v111 = vld [vmem:[#allocation3 + $0x134] sm:$0xf]
    %v112 = vld [vmem:[#allocation3 + $0x138] sm:$0xff]
    %v113 = vld [vmem:[#allocation3 + $0x140] sm:$0xf]
    %v114 = vld [vmem:[#allocation3 + $0x144] sm:$0xff]
    %v115 = vld [vmem:[#allocation3 + $0x14c] sm:$0xf]
    %v116 = vld [vmem:[#allocation3 + $0x150] sm:$0xff]
    %v117 = vld [vmem:[#allocation3 + $0x158] sm:$0xf]
    %v118 = vld [vmem:[#allocation3 + $0x15c] sm:$0xff]
    %v119 = vld [vmem:[#allocation3 + $0x164] sm:$0xf]
    %v120 = vld [vmem:[#allocation3 + $0x168] sm:$0xff]
    %v121 = vld [vmem:[#allocation3 + $0x170] sm:$0xf]
    %v122 = vld [vmem:[#allocation3 + $0x174] sm:$0xff]
    %v123 = vld [vmem:[#allocation3 + $0x17c] sm:$0xf]
    %v124 = vld [vmem:[#allocation3 + $0x180] sm:$0xff]
    %v125 = vld [vmem:[#allocation3 + $0x188] sm:$0xf]
    %v126 = vld [vmem:[#allocation3 + $0x18c] sm:$0xff]
    %v127 = vld [vmem:[#allocation3 + $0x194] sm:$0xf]
    %v128 = vld [vmem:[#allocation3 + $0x198] sm:$0xff]
    %v129 = vld [vmem:[#allocation3 + $0x1a0] sm:$0xf]
    %v130 = vld [vmem:[#allocation3 + $0x1a4] sm:$0xff]
    %v131 = vld [vmem:[#allocation3 + $0x1ac] sm:$0xf]
    %v132 = vld [vmem:[#allocation3 + $0x1b0] sm:$0xff]
    %v133 = vld [vmem:[#allocation3 + $0x1b8] sm:$0xf]
    %v134 = vld [vmem:[#allocation3 + $0x1bc] sm:$0xff]
    %v135 = vld [vmem:[#allocation3 + $0x1c4] sm:$0xf]
    %v136 = vld [vmem:[#allocation3 + $0x1c8] sm:$0xff]
    %v137 = vld [vmem:[#allocation3 + $0x1d0] sm:$0xf]
    %v138 = vld [vmem:[#allocation3 + $0x1d4] sm:$0xff]
    %v139 = vld [vmem:[#allocation3 + $0x1dc] sm:$0xf]
    %v140 = vld [vmem:[#allocation3 + $0x1e0] sm:$0xff]
    %v141 = vld [vmem:[#allocation3 + $0x1e8] sm:$0xf]
    %v142 = vld [vmem:[#allocation3 + $0x1ec] sm:$0xff]
    %v143 = vld [vmem:[#allocation3 + $0x1f4] sm:$0xf]
    %v144 = vld [vmem:[#allocation3 + $0x1f8] sm:$0xff]
    %v145 = vld [vmem:[#allocation3 + $0x200] sm:$0xf]
    %v146 = vld [vmem:[#allocation3 + $0x204] sm:$0xff]
    %v147 = vld [vmem:[#allocation3 + $0x20c] sm:$0xf]
    %v148 = vld [vmem:[#allocation3 + $0x210] sm:$0xff]
    %v149 = vld [vmem:[#allocation3 + $0x218] sm:$0xf]
    %v150 = vld [vmem:[#allocation3 + $0x21c] sm:$0xff]
    %v151 = vld [vmem:[#allocation3 + $0x224] sm:$0xf]
    %v152 = vld [vmem:[#allocation3 + $0x228] sm:$0xff]
    %v153 = vld [vmem:[#allocation3 + $0x230] sm:$0xf]
    %v154 = vld [vmem:[#allocation3 + $0x234] sm:$0xff]
    %v155 = vld [vmem:[#allocation3 + $0x23c] sm:$0xf]
    %v156 = vld [vmem:[#allocation3 + $0x240] sm:$0xff]
    %v157 = vld [vmem:[#allocation3 + $0x248] sm:$0xf]
    %v158 = vld [vmem:[#allocation3 + $0x24c] sm:$0xff]
    %v159 = vld [vmem:[#allocation3 + $0x254] sm:$0xf]
    %v160 = vld [vmem:[#allocation3 + $0x258] sm:$0xff]
    %v161 = vld [vmem:[#allocation3 + $0x260] sm:$0xf]
    %v162 = vld [vmem:[#allocation3 + $0x264] sm:$0xff]
    %v163 = vld [vmem:[#allocation3 + $0x26c] sm:$0xf]
    %v164 = vld [vmem:[#allocation3 + $0x270] sm:$0xff]
    %v165 = vld [vmem:[#allocation3 + $0x278] sm:$0xf]
    %v166 = vld [vmem:[#allocation3 + $0x27c] sm:$0xff]
    %v167 = vld [vmem:[#allocation3 + $0x284] sm:$0xf]
    %v168 = vld [vmem:[#allocation3 + $0x288] sm:$0xff]
    %v169 = vld [vmem:[#allocation3 + $0x290] sm:$0xf]
    %v170 = vld [vmem:[#allocation3 + $0x294] sm:$0xff]
    %v171 = vld [vmem:[#allocation3 + $0x29c] sm:$0xf]
    %v172 = vld [vmem:[#allocation3 + $0x2a0] sm:$0xff]
    %v173 = vld [vmem:[#allocation3 + $0x2a8] sm:$0xf]
    %v174 = vld [vmem:[#allocation3 + $0x2ac] sm:$0xff]
    %v175 = vld [vmem:[#allocation3 + $0x2b4] sm:$0xf]
    %v176 = vld [vmem:[#allocation3 + $0x2b8] sm:$0xff]
    %v177 = vld [vmem:[#allocation3 + $0x2c0] sm:$0xf]
    %v178 = vld [vmem:[#allocation3 + $0x2c4] sm:$0xff]
    %v179 = vld [vmem:[#allocation3 + $0x2cc] sm:$0xf]
    %v180 = vld [vmem:[#allocation3 + $0x2d0] sm:$0xff]
    %v181 = vld [vmem:[#allocation3 + $0x2d8] sm:$0xf]
    %v182 = vld [vmem:[#allocation3 + $0x2dc] sm:$0xff]
    %v183 = vld [vmem:[#allocation3 + $0x2e4] sm:$0xf]
    %v184 = vld [vmem:[#allocation3 + $0x2e8] sm:$0xff]
    %v185 = vld [vmem:[#allocation3 + $0x2f0] sm:$0xf]
    %v186 = vld [vmem:[#allocation3 + $0x2f4] sm:$0xff]
    %v187 = vld [vmem:[#allocation3 + $0x2fc] sm:$0xf]
    %v188 = vld [vmem:[#allocation3 + $0x300] sm:$0xff]
    %v189 = vld [vmem:[#allocation3 + $0x308] sm:$0xf]
    %v190 = vld [vmem:[#allocation3 + $0x30c] sm:$0xff]
    %v191 = vld [vmem:[#allocation3 + $0x314] sm:$0xf]
    %v192 = vld [vmem:[#allocation3 + $0x318] sm:$0xff]
    %v193 = vld [vmem:[#allocation3 + $0x320] sm:$0xf]
    %v194 = vld [vmem:[#allocation3 + $0x324] sm:$0xff]
    %v195 = vld [vmem:[#allocation3 + $0x32c] sm:$0xf]
    %v196 = vld [vmem:[#allocation3 + $0x330] sm:$0xff]
    %v197 = vld [vmem:[#allocation3 + $0x338] sm:$0xf]
    %v198 = vld [vmem:[#allocation3 + $0x33c] sm:$0xff]
    %v199 = vld [vmem:[#allocation3 + $0x344] sm:$0xf]
    %v200 = vld [vmem:[#allocation3 + $0x348] sm:$0xff]
    %v201 = vld [vmem:[#allocation3 + $0x350] sm:$0xf]
    %v202 = vld [vmem:[#allocation3 + $0x354] sm:$0xff]
    %v203 = vld [vmem:[#allocation3 + $0x35c] sm:$0xf]
    %v204 = vld [vmem:[#allocation3 + $0x360] sm:$0xff]
    %v205 = vld [vmem:[#allocation3 + $0x368] sm:$0xf]
    %v206 = vld [vmem:[#allocation3 + $0x36c] sm:$0xff]
    %v207 = vld [vmem:[#allocation3 + $0x374] sm:$0xf]
    %v208 = vld [vmem:[#allocation3 + $0x378] sm:$0xff]
    %v209 = vld [vmem:[#allocation3 + $0x380] sm:$0xf]
    %v210 = vld [vmem:[#allocation3 + $0x384] sm:$0xff]
    %v211 = vld [vmem:[#allocation3 + $0x38c] sm:$0xf]
    %v212 = vld [vmem:[#allocation3 + $0x390] sm:$0xff]
    %v213 = vld [vmem:[#allocation3 + $0x398] sm:$0xf]
    %v214 = vld [vmem:[#allocation3 + $0x39c] sm:$0xff]
    %v215 = vld [vmem:[#allocation3 + $0x3a4] sm:$0xf]
    %v216 = vld [vmem:[#allocation3 + $0x3a8] sm:$0xff]
    %v217 = vld [vmem:[#allocation3 + $0x3b0] sm:$0xf]
    %v218 = vld [vmem:[#allocation3 + $0x3b4] sm:$0xff]
    %v219 = vld [vmem:[#allocation3 + $0x3bc] sm:$0xf]
    %v220 = vld [vmem:[#allocation3 + $0x3c0] sm:$0xff]
    %v221 = vld [vmem:[#allocation3 + $0x3c8] sm:$0xf]
    %v222 = vld [vmem:[#allocation3 + $0x3cc] sm:$0xff]
    %v223 = vld [vmem:[#allocation3 + $0x3d4] sm:$0xf]
    %v224 = vld [vmem:[#allocation3 + $0x3d8] sm:$0xff]
    %v225 = vld [vmem:[#allocation3 + $0x3e0] sm:$0xf]
    %v226 = vld [vmem:[#allocation3 + $0x3e4] sm:$0xff]
    %v227 = vld [vmem:[#allocation3 + $0x3ec] sm:$0xf]
    %v228 = vld [vmem:[#allocation3 + $0x3f0] sm:$0xff]
    %v229 = vld [vmem:[#allocation3 + $0x3f8] sm:$0xf]
    %v230 = vld [vmem:[#allocation3 + $0x3fc] sm:$0xff]
    %v231 = vld [vmem:[#allocation3 + $0x404] sm:$0xf]
    %v232 = vld [vmem:[#allocation3 + $0x408] sm:$0xff]
    %v233 = vld [vmem:[#allocation3 + $0x410] sm:$0xf]
    %v234 = vld [vmem:[#allocation3 + $0x414] sm:$0xff]
    %v235 = vld [vmem:[#allocation3 + $0x41c] sm:$0xf]
    %v236 = vld [vmem:[#allocation3 + $0x420] sm:$0xff]
    %v237 = vld [vmem:[#allocation3 + $0x428] sm:$0xf]
    %v238 = vld [vmem:[#allocation3 + $0x42c] sm:$0xff]
    %v239 = vld [vmem:[#allocation3 + $0x434] sm:$0xf]
    %v240 = vld [vmem:[#allocation3 + $0x438] sm:$0xff]
    %v241 = vld [vmem:[#allocation3 + $0x440] sm:$0xf]
    %v242 = vld [vmem:[#allocation3 + $0x444] sm:$0xff]
    %v243 = vld [vmem:[#allocation3 + $0x44c] sm:$0xf]
    %v244 = vld [vmem:[#allocation3 + $0x450] sm:$0xff]
    %v245 = vld [vmem:[#allocation3 + $0x458] sm:$0xf]
    %v246 = vld [vmem:[#allocation3 + $0x45c] sm:$0xff]
    %v247 = vld [vmem:[#allocation3 + $0x464] sm:$0xf]
    %v248 = vld [vmem:[#allocation3 + $0x468] sm:$0xff]
    %v249 = vld [vmem:[#allocation3 + $0x470] sm:$0xf]
    %v250 = vld [vmem:[#allocation3 + $0x474] sm:$0xff]
    %v251 = vld [vmem:[#allocation3 + $0x47c] sm:$0xf]
    %v252 = vld [vmem:[#allocation3 + $0x480] sm:$0xff]
    %v253 = vld [vmem:[#allocation3 + $0x488] sm:$0xf]
    %v254 = vld [vmem:[#allocation3 + $0x48c] sm:$0xff]
    %v255 = vld [vmem:[#allocation3 + $0x494] sm:$0xf]
    %v256 = vld [vmem:[#allocation3 + $0x498] sm:$0xff]
    %v257 = vld [vmem:[#allocation3 + $0x4a0] sm:$0xf]
    %v258 = vld [vmem:[#allocation3 + $0x4a4] sm:$0xff]
    %v259 = vld [vmem:[#allocation3 + $0x4ac] sm:$0xf]
    %v260 = vld [vmem:[#allocation3 + $0x4b0] sm:$0xff]
    %v261 = vld [vmem:[#allocation3 + $0x4b8] sm:$0xf]
    %v262 = vld [vmem:[#allocation3 + $0x4bc] sm:$0xff]
    %v263 = vld [vmem:[#allocation3 + $0x4c4] sm:$0xf]
    %v264 = vld [vmem:[#allocation3 + $0x4c8] sm:$0xff]
    %v265 = vld [vmem:[#allocation3 + $0x4d0] sm:$0xf]
    %v266 = vld [vmem:[#allocation3 + $0x4d4] sm:$0xff]
    %v267 = vld [vmem:[#allocation3 + $0x4dc] sm:$0xf]
    %v268 = vld [vmem:[#allocation3 + $0x4e0] sm:$0xff]
    %v269 = vld [vmem:[#allocation3 + $0x4e8] sm:$0xf]
    %v270 = vld [vmem:[#allocation3 + $0x4ec] sm:$0xff]
    %v271 = vld [vmem:[#allocation3 + $0x4f4] sm:$0xf]
    %v272 = vld [vmem:[#allocation3 + $0x4f8] sm:$0xff]
    %v273 = vld [vmem:[#allocation3 + $0x500] sm:$0xf]
    %v274 = vld [vmem:[#allocation3 + $0x504] sm:$0xff]
    %v275 = vld [vmem:[#allocation3 + $0x50c] sm:$0xf]
    %v276 = vld [vmem:[#allocation3 + $0x510] sm:$0xff]
    %v277 = vld [vmem:[#allocation3 + $0x518] sm:$0xf]
    %v278 = vld [vmem:[#allocation3 + $0x51c] sm:$0xff]
    %v279 = vld [vmem:[#allocation3 + $0x524] sm:$0xf]
    %v280 = vld [vmem:[#allocation3 + $0x528] sm:$0xff]
    %v281 = vld [vmem:[#allocation3 + $0x530] sm:$0xf]
    %v282 = vld [vmem:[#allocation3 + $0x534] sm:$0xff]
    %v283 = vld [vmem:[#allocation3 + $0x53c] sm:$0xf]
    %v284 = vld [vmem:[#allocation3 + $0x540] sm:$0xff]
    %v285 = vld [vmem:[#allocation3 + $0x548] sm:$0xf]
    %v286 = vld [vmem:[#allocation3 + $0x54c] sm:$0xff]
    %v287 = vld [vmem:[#allocation3 + $0x554] sm:$0xf]
    %v288 = vld [vmem:[#allocation3 + $0x558] sm:$0xff]
    %v289 = vld [vmem:[#allocation3 + $0x560] sm:$0xf]
    %v290 = vld [vmem:[#allocation3 + $0x564] sm:$0xff]
    %v291 = vld [vmem:[#allocation3 + $0x56c] sm:$0xf]
    %v292 = vld [vmem:[#allocation3 + $0x570] sm:$0xff]
    %v293 = vld [vmem:[#allocation3 + $0x578] sm:$0xf]
    %v294 = vld [vmem:[#allocation3 + $0x57c] sm:$0xff]
    %v295 = vld [vmem:[#allocation3 + $0x584] sm:$0xf]
    %v296 = vld [vmem:[#allocation3 + $0x588] sm:$0xff]
    %v297 = vld [vmem:[#allocation3 + $0x590] sm:$0xf]
    %v298 = vld [vmem:[#allocation3 + $0x594] sm:$0xff]
    %v299 = vld [vmem:[#allocation3 + $0x59c] sm:$0xf]
    %v300 = vld [vmem:[#allocation3 + $0x5a0] sm:$0xff]
    %v301 = vld [vmem:[#allocation3 + $0x5a8] sm:$0xf]
    %v302 = vld [vmem:[#allocation3 + $0x5ac] sm:$0xff]
    %v303 = vld [vmem:[#allocation3 + $0x5b4] sm:$0xf]
    %v304 = vld [vmem:[#allocation3 + $0x5b8] sm:$0xff]
    %v305 = vld [vmem:[#allocation3 + $0x5c0] sm:$0xf]
    %v306 = vld [vmem:[#allocation3 + $0x5c4] sm:$0xff]
    %v307 = vld [vmem:[#allocation3 + $0x5cc] sm:$0xf]
    %v308 = vld [vmem:[#allocation3 + $0x5d0] sm:$0xff]
    %v309 = vld [vmem:[#allocation3 + $0x5d8] sm:$0xf]
    %v310 = vld [vmem:[#allocation3 + $0x5dc] sm:$0xff]
    %v311 = vld [vmem:[#allocation3 + $0x5e4] sm:$0xf]
    %v312 = vld [vmem:[#allocation3 + $0x5e8] sm:$0xff]
    %v313 = vld [vmem:[#allocation3 + $0x5f0] sm:$0xf]
    %v314 = vld [vmem:[#allocation3 + $0x5f4] sm:$0xff]
    %v315 = vld [vmem:[#allocation3 + $0x5fc] sm:$0xf]
    %v316 = vld [vmem:[%s2] sm:$0x7]
    %v318 = vlaneseq
    %v319 = vshrl.u32 %v318, 7
    %v320 = vsub.s32 0, %v319
    %v321 = vrot.slane %v316, %v320
    %v322 = vlaneseq
    %v323 = vshrl.u32 %v322, 7
    %v324 = vsub.s32 1, %v323
    %v325 = vrot.slane %v316, %v324
    %v326 = vlaneseq
    %v327 = vshrl.u32 %v326, 7
    %v328 = vsub.s32 2, %v327
    %v329 = vrot.slane %v316, %v328
    %v337 = vunpack.c.l.b16 %v56
    %v338 = vunpack.c.h.b16 %v56
    %v339 = vunpack.c.l.b16 %v57
    %v340 = vunpack.c.h.b16 %v57
    %v341 = vunpack.c.l.b16 %v58
    %v342 = vunpack.c.h.b16 %v58
    %v343 = vunpack.c.l.b16 %v59
    %v344 = vunpack.c.h.b16 %v59
    %v345 = vpack.c.b16 %v337, %v337
    %v346 = vpack.c.b16 %v338, %v338
    %v347 = vpack.c.b16 %v339, %v339
    %v348 = vpack.c.b16 %v340, %v340
    %v349 = vpack.c.b16 %v341, %v341
    %v350 = vpack.c.b16 %v342, %v342
    %v351 = vpack.c.b16 %v343, %v343
    %v352 = vpack.c.b16 %v344, %v344
    %v617 = vunpack.c.l.b16 %v60
    %v618 = vunpack.c.h.b16 %v60
    %v619 = vunpack.c.l.b16 %v61
    %v620 = vunpack.c.l.b16 %v62
    %v621 = vunpack.c.h.b16 %v62
    %v622 = vunpack.c.l.b16 %v63
    %v623 = vunpack.c.l.b16 %v64
    %v624 = vunpack.c.h.b16 %v64
    %v625 = vunpack.c.l.b16 %v65
    %v626 = vunpack.c.l.b16 %v66
    %v627 = vunpack.c.h.b16 %v66
    %v628 = vunpack.c.l.b16 %v67
    %v629 = vunpack.c.l.b16 %v68
    %v630 = vunpack.c.h.b16 %v68
    %v631 = vunpack.c.l.b16 %v69
    %v632 = vunpack.c.l.b16 %v70
    %v633 = vunpack.c.h.b16 %v70
    %v634 = vunpack.c.l.b16 %v71
    %v635 = vunpack.c.l.b16 %v72
    %v636 = vunpack.c.h.b16 %v72
    %v637 = vunpack.c.l.b16 %v73
    %v638 = vunpack.c.l.b16 %v74
    %v639 = vunpack.c.h.b16 %v74
    %v640 = vunpack.c.l.b16 %v75
    %v641 = vunpack.c.l.b16 %v76
    %v642 = vunpack.c.h.b16 %v76
    %v643 = vunpack.c.l.b16 %v77
    %v644 = vunpack.c.l.b16 %v78
    %v645 = vunpack.c.h.b16 %v78
    %v646 = vunpack.c.l.b16 %v79
    %v647 = vunpack.c.l.b16 %v80
    %v648 = vunpack.c.h.b16 %v80
    %v649 = vunpack.c.l.b16 %v81
    %v650 = vunpack.c.l.b16 %v82
    %v651 = vunpack.c.h.b16 %v82
    %v652 = vunpack.c.l.b16 %v83
    %v653 = vunpack.c.l.b16 %v84
    %v654 = vunpack.c.h.b16 %v84
    %v655 = vunpack.c.l.b16 %v85
    %v656 = vunpack.c.l.b16 %v86
    %v657 = vunpack.c.h.b16 %v86
    %v658 = vunpack.c.l.b16 %v87
    %v659 = vunpack.c.l.b16 %v88
    %v660 = vunpack.c.h.b16 %v88
    %v661 = vunpack.c.l.b16 %v89
    %v662 = vunpack.c.l.b16 %v90
    %v663 = vunpack.c.h.b16 %v90
    %v664 = vunpack.c.l.b16 %v91
    %v665 = vunpack.c.l.b16 %v92
    %v666 = vunpack.c.h.b16 %v92
    %v667 = vunpack.c.l.b16 %v93
    %v668 = vunpack.c.l.b16 %v94
    %v669 = vunpack.c.h.b16 %v94
    %v670 = vunpack.c.l.b16 %v95
    %v671 = vunpack.c.l.b16 %v96
    %v672 = vunpack.c.h.b16 %v96
    %v673 = vunpack.c.l.b16 %v97
    %v674 = vunpack.c.l.b16 %v98
    %v675 = vunpack.c.h.b16 %v98
    %v676 = vunpack.c.l.b16 %v99
    %v677 = vunpack.c.l.b16 %v100
    %v678 = vunpack.c.h.b16 %v100
    %v679 = vunpack.c.l.b16 %v101
    %v680 = vunpack.c.l.b16 %v102
    %v681 = vunpack.c.h.b16 %v102
    %v682 = vunpack.c.l.b16 %v103
    %v683 = vunpack.c.l.b16 %v104
    %v684 = vunpack.c.h.b16 %v104
    %v685 = vunpack.c.l.b16 %v105
    %v686 = vunpack.c.l.b16 %v106
    %v687 = vunpack.c.h.b16 %v106
    %v688 = vunpack.c.l.b16 %v107
    %v689 = vunpack.c.l.b16 %v108
    %v690 = vunpack.c.h.b16 %v108
    %v691 = vunpack.c.l.b16 %v109
    %v692 = vunpack.c.l.b16 %v110
    %v693 = vunpack.c.h.b16 %v110
    %v694 = vunpack.c.l.b16 %v111
    %v695 = vunpack.c.l.b16 %v112
    %v696 = vunpack.c.h.b16 %v112
    %v697 = vunpack.c.l.b16 %v113
    %v698 = vunpack.c.l.b16 %v114
    %v699 = vunpack.c.h.b16 %v114
    %v700 = vunpack.c.l.b16 %v115
    %v701 = vunpack.c.l.b16 %v116
    %v702 = vunpack.c.h.b16 %v116
    %v703 = vunpack.c.l.b16 %v117
    %v704 = vunpack.c.l.b16 %v118
    %v705 = vunpack.c.h.b16 %v118
    %v706 = vunpack.c.l.b16 %v119
    %v707 = vunpack.c.l.b16 %v120
    %v708 = vunpack.c.h.b16 %v120
    %v709 = vunpack.c.l.b16 %v121
    %v710 = vunpack.c.l.b16 %v122
    %v711 = vunpack.c.h.b16 %v122
    %v712 = vunpack.c.l.b16 %v123
    %v713 = vunpack.c.l.b16 %v124
    %v714 = vunpack.c.h.b16 %v124
    %v715 = vunpack.c.l.b16 %v125
    %v716 = vunpack.c.l.b16 %v126
    %v717 = vunpack.c.h.b16 %v126
    %v718 = vunpack.c.l.b16 %v127
    %v719 = vunpack.c.l.b16 %v128
    %v720 = vunpack.c.h.b16 %v128
    %v721 = vunpack.c.l.b16 %v129
    %v722 = vunpack.c.l.b16 %v130
    %v723 = vunpack.c.h.b16 %v130
    %v724 = vunpack.c.l.b16 %v131
    %v725 = vunpack.c.l.b16 %v132
    %v726 = vunpack.c.h.b16 %v132
    %v727 = vunpack.c.l.b16 %v133
    %v728 = vunpack.c.l.b16 %v134
    %v729 = vunpack.c.h.b16 %v134
    %v730 = vunpack.c.l.b16 %v135
    %v731 = vunpack.c.l.b16 %v136
    %v732 = vunpack.c.h.b16 %v136
    %v733 = vunpack.c.l.b16 %v137
    %v734 = vunpack.c.l.b16 %v138
    %v735 = vunpack.c.h.b16 %v138
    %v736 = vunpack.c.l.b16 %v139
    %v737 = vunpack.c.l.b16 %v140
    %v738 = vunpack.c.h.b16 %v140
    %v739 = vunpack.c.l.b16 %v141
    %v740 = vunpack.c.l.b16 %v142
    %v741 = vunpack.c.h.b16 %v142
    %v742 = vunpack.c.l.b16 %v143
    %v743 = vunpack.c.l.b16 %v144
    %v744 = vunpack.c.h.b16 %v144
    %v745 = vunpack.c.l.b16 %v145
    %v746 = vunpack.c.l.b16 %v146
    %v747 = vunpack.c.h.b16 %v146
    %v748 = vunpack.c.l.b16 %v147
    %v749 = vunpack.c.l.b16 %v148
    %v750 = vunpack.c.h.b16 %v148
    %v751 = vunpack.c.l.b16 %v149
    %v752 = vunpack.c.l.b16 %v150
    %v753 = vunpack.c.h.b16 %v150
    %v754 = vunpack.c.l.b16 %v151
    %v755 = vunpack.c.l.b16 %v152
    %v756 = vunpack.c.h.b16 %v152
    %v757 = vunpack.c.l.b16 %v153
    %v758 = vunpack.c.l.b16 %v154
    %v759 = vunpack.c.h.b16 %v154
    %v760 = vunpack.c.l.b16 %v155
    %v761 = vunpack.c.l.b16 %v156
    %v762 = vunpack.c.h.b16 %v156
    %v763 = vunpack.c.l.b16 %v157
    %v764 = vunpack.c.l.b16 %v158
    %v765 = vunpack.c.h.b16 %v158
    %v766 = vunpack.c.l.b16 %v159
    %v767 = vunpack.c.l.b16 %v160
    %v768 = vunpack.c.h.b16 %v160
    %v769 = vunpack.c.l.b16 %v161
    %v770 = vunpack.c.l.b16 %v162
    %v771 = vunpack.c.h.b16 %v162
    %v772 = vunpack.c.l.b16 %v163
    %v773 = vunpack.c.l.b16 %v164
    %v774 = vunpack.c.h.b16 %v164
    %v775 = vunpack.c.l.b16 %v165
    %v776 = vunpack.c.l.b16 %v166
    %v777 = vunpack.c.h.b16 %v166
    %v778 = vunpack.c.l.b16 %v167
    %v779 = vunpack.c.l.b16 %v168
    %v780 = vunpack.c.h.b16 %v168
    %v781 = vunpack.c.l.b16 %v169
    %v782 = vunpack.c.l.b16 %v170
    %v783 = vunpack.c.h.b16 %v170
    %v784 = vunpack.c.l.b16 %v171
    %v785 = vunpack.c.l.b16 %v172
    %v786 = vunpack.c.h.b16 %v172
    %v787 = vunpack.c.l.b16 %v173
    %v788 = vunpack.c.l.b16 %v174
    %v789 = vunpack.c.h.b16 %v174
    %v790 = vunpack.c.l.b16 %v175
    %v791 = vunpack.c.l.b16 %v176
    %v792 = vunpack.c.h.b16 %v176
    %v793 = vunpack.c.l.b16 %v177
    %v794 = vunpack.c.l.b16 %v178
    %v795 = vunpack.c.h.b16 %v178
    %v796 = vunpack.c.l.b16 %v179
    %v797 = vunpack.c.l.b16 %v180
    %v798 = vunpack.c.h.b16 %v180
    %v799 = vunpack.c.l.b16 %v181
    %v800 = vunpack.c.l.b16 %v182
    %v801 = vunpack.c.h.b16 %v182
    %v802 = vunpack.c.l.b16 %v183
    %v803 = vunpack.c.l.b16 %v184
    %v804 = vunpack.c.h.b16 %v184
    %v805 = vunpack.c.l.b16 %v185
    %v806 = vunpack.c.l.b16 %v186
    %v807 = vunpack.c.h.b16 %v186
    %v808 = vunpack.c.l.b16 %v187
    %v809 = vunpack.c.l.b16 %v188
    %v810 = vunpack.c.h.b16 %v188
    %v811 = vunpack.c.l.b16 %v189
    %v812 = vunpack.c.l.b16 %v190
    %v813 = vunpack.c.h.b16 %v190
    %v814 = vunpack.c.l.b16 %v191
    %v815 = vunpack.c.l.b16 %v192
    %v816 = vunpack.c.h.b16 %v192
    %v817 = vunpack.c.l.b16 %v193
    %v818 = vunpack.c.l.b16 %v194
    %v819 = vunpack.c.h.b16 %v194
    %v820 = vunpack.c.l.b16 %v195
    %v821 = vunpack.c.l.b16 %v196
    %v822 = vunpack.c.h.b16 %v196
    %v823 = vunpack.c.l.b16 %v197
    %v824 = vunpack.c.l.b16 %v198
    %v825 = vunpack.c.h.b16 %v198
    %v826 = vunpack.c.l.b16 %v199
    %v827 = vunpack.c.l.b16 %v200
    %v828 = vunpack.c.h.b16 %v200
    %v829 = vunpack.c.l.b16 %v201
    %v830 = vunpack.c.l.b16 %v202
    %v831 = vunpack.c.h.b16 %v202
    %v832 = vunpack.c.l.b16 %v203
    %v833 = vunpack.c.l.b16 %v204
    %v834 = vunpack.c.h.b16 %v204
    %v835 = vunpack.c.l.b16 %v205
    %v836 = vunpack.c.l.b16 %v206
    %v837 = vunpack.c.h.b16 %v206
    %v838 = vunpack.c.l.b16 %v207
    %v839 = vunpack.c.l.b16 %v208
    %v840 = vunpack.c.h.b16 %v208
    %v841 = vunpack.c.l.b16 %v209
    %v842 = vunpack.c.l.b16 %v210
    %v843 = vunpack.c.h.b16 %v210
    %v844 = vunpack.c.l.b16 %v211
    %v845 = vunpack.c.l.b16 %v212
    %v846 = vunpack.c.h.b16 %v212
    %v847 = vunpack.c.l.b16 %v213
    %v848 = vunpack.c.l.b16 %v214
    %v849 = vunpack.c.h.b16 %v214
    %v850 = vunpack.c.l.b16 %v215
    %v851 = vunpack.c.l.b16 %v216
    %v852 = vunpack.c.h.b16 %v216
    %v853 = vunpack.c.l.b16 %v217
    %v854 = vunpack.c.l.b16 %v218
    %v855 = vunpack.c.h.b16 %v218
    %v856 = vunpack.c.l.b16 %v219
    %v857 = vunpack.c.l.b16 %v220
    %v858 = vunpack.c.h.b16 %v220
    %v859 = vunpack.c.l.b16 %v221
    %v860 = vunpack.c.l.b16 %v222
    %v861 = vunpack.c.h.b16 %v222
    %v862 = vunpack.c.l.b16 %v223
    %v863 = vunpack.c.l.b16 %v224
    %v864 = vunpack.c.h.b16 %v224
    %v865 = vunpack.c.l.b16 %v225
    %v866 = vunpack.c.l.b16 %v226
    %v867 = vunpack.c.h.b16 %v226
    %v868 = vunpack.c.l.b16 %v227
    %v869 = vunpack.c.l.b16 %v228
    %v870 = vunpack.c.h.b16 %v228
    %v871 = vunpack.c.l.b16 %v229
    %v872 = vunpack.c.l.b16 %v230
    %v873 = vunpack.c.h.b16 %v230
    %v874 = vunpack.c.l.b16 %v231
    %v875 = vunpack.c.l.b16 %v232
    %v876 = vunpack.c.h.b16 %v232
    %v877 = vunpack.c.l.b16 %v233
    %v878 = vunpack.c.l.b16 %v234
    %v879 = vunpack.c.h.b16 %v234
    %v880 = vunpack.c.l.b16 %v235
    %v881 = vunpack.c.l.b16 %v236
    %v882 = vunpack.c.h.b16 %v236
    %v883 = vunpack.c.l.b16 %v237
    %v884 = vunpack.c.l.b16 %v238
    %v885 = vunpack.c.h.b16 %v238
    %v886 = vunpack.c.l.b16 %v239
    %v887 = vunpack.c.l.b16 %v240
    %v888 = vunpack.c.h.b16 %v240
    %v889 = vunpack.c.l.b16 %v241
    %v890 = vunpack.c.l.b16 %v242
    %v891 = vunpack.c.h.b16 %v242
    %v892 = vunpack.c.l.b16 %v243
    %v893 = vunpack.c.l.b16 %v244
    %v894 = vunpack.c.h.b16 %v244
    %v895 = vunpack.c.l.b16 %v245
    %v896 = vunpack.c.l.b16 %v246
    %v897 = vunpack.c.h.b16 %v246
    %v898 = vunpack.c.l.b16 %v247
    %v899 = vunpack.c.l.b16 %v248
    %v900 = vunpack.c.h.b16 %v248
    %v901 = vunpack.c.l.b16 %v249
    %v902 = vunpack.c.l.b16 %v250
    %v903 = vunpack.c.h.b16 %v250
    %v904 = vunpack.c.l.b16 %v251
    %v905 = vunpack.c.l.b16 %v252
    %v906 = vunpack.c.h.b16 %v252
    %v907 = vunpack.c.l.b16 %v253
    %v908 = vunpack.c.l.b16 %v254
    %v909 = vunpack.c.h.b16 %v254
    %v910 = vunpack.c.l.b16 %v255
    %v911 = vunpack.c.l.b16 %v256
    %v912 = vunpack.c.h.b16 %v256
    %v913 = vunpack.c.l.b16 %v257
    %v914 = vunpack.c.l.b16 %v258
    %v915 = vunpack.c.h.b16 %v258
    %v916 = vunpack.c.l.b16 %v259
    %v917 = vunpack.c.l.b16 %v260
    %v918 = vunpack.c.h.b16 %v260
    %v919 = vunpack.c.l.b16 %v261
    %v920 = vunpack.c.l.b16 %v262
    %v921 = vunpack.c.h.b16 %v262
    %v922 = vunpack.c.l.b16 %v263
    %v923 = vunpack.c.l.b16 %v264
    %v924 = vunpack.c.h.b16 %v264
    %v925 = vunpack.c.l.b16 %v265
    %v926 = vunpack.c.l.b16 %v266
    %v927 = vunpack.c.h.b16 %v266
    %v928 = vunpack.c.l.b16 %v267
    %v929 = vunpack.c.l.b16 %v268
    %v930 = vunpack.c.h.b16 %v268
    %v931 = vunpack.c.l.b16 %v269
    %v932 = vunpack.c.l.b16 %v270
    %v933 = vunpack.c.h.b16 %v270
    %v934 = vunpack.c.l.b16 %v271
    %v935 = vunpack.c.l.b16 %v272
    %v936 = vunpack.c.h.b16 %v272
    %v937 = vunpack.c.l.b16 %v273
    %v938 = vunpack.c.l.b16 %v274
    %v939 = vunpack.c.h.b16 %v274
    %v940 = vunpack.c.l.b16 %v275
    %v941 = vunpack.c.l.b16 %v276
    %v942 = vunpack.c.h.b16 %v276
    %v943 = vunpack.c.l.b16 %v277
    %v944 = vunpack.c.l.b16 %v278
    %v945 = vunpack.c.h.b16 %v278
    %v946 = vunpack.c.l.b16 %v279
    %v947 = vunpack.c.l.b16 %v280
    %v948 = vunpack.c.h.b16 %v280
    %v949 = vunpack.c.l.b16 %v281
    %v950 = vunpack.c.l.b16 %v282
    %v951 = vunpack.c.h.b16 %v282
    %v952 = vunpack.c.l.b16 %v283
    %v953 = vunpack.c.l.b16 %v284
    %v954 = vunpack.c.h.b16 %v284
    %v955 = vunpack.c.l.b16 %v285
    %v956 = vunpack.c.l.b16 %v286
    %v957 = vunpack.c.h.b16 %v286
    %v958 = vunpack.c.l.b16 %v287
    %v959 = vunpack.c.l.b16 %v288
    %v960 = vunpack.c.h.b16 %v288
    %v961 = vunpack.c.l.b16 %v289
    %v962 = vunpack.c.l.b16 %v290
    %v963 = vunpack.c.h.b16 %v290
    %v964 = vunpack.c.l.b16 %v291
    %v965 = vunpack.c.l.b16 %v292
    %v966 = vunpack.c.h.b16 %v292
    %v967 = vunpack.c.l.b16 %v293
    %v968 = vunpack.c.l.b16 %v294
    %v969 = vunpack.c.h.b16 %v294
    %v970 = vunpack.c.l.b16 %v295
    %v971 = vunpack.c.l.b16 %v296
    %v972 = vunpack.c.h.b16 %v296
    %v973 = vunpack.c.l.b16 %v297
    %v974 = vunpack.c.l.b16 %v298
    %v975 = vunpack.c.h.b16 %v298
    %v976 = vunpack.c.l.b16 %v299
    %v977 = vunpack.c.l.b16 %v300
    %v978 = vunpack.c.h.b16 %v300
    %v979 = vunpack.c.l.b16 %v301
    %v980 = vunpack.c.l.b16 %v302
    %v981 = vunpack.c.h.b16 %v302
    %v982 = vunpack.c.l.b16 %v303
    %v983 = vunpack.c.l.b16 %v304
    %v984 = vunpack.c.h.b16 %v304
    %v985 = vunpack.c.l.b16 %v305
    %v986 = vunpack.c.l.b16 %v306
    %v987 = vunpack.c.h.b16 %v306
    %v988 = vunpack.c.l.b16 %v307
    %v989 = vunpack.c.l.b16 %v308
    %v990 = vunpack.c.h.b16 %v308
    %v991 = vunpack.c.l.b16 %v309
    %v992 = vunpack.c.l.b16 %v310
    %v993 = vunpack.c.h.b16 %v310
    %v994 = vunpack.c.l.b16 %v311
    %v995 = vunpack.c.l.b16 %v312
    %v996 = vunpack.c.h.b16 %v312
    %v997 = vunpack.c.l.b16 %v313
    %v998 = vunpack.c.l.b16 %v314
    %v999 = vunpack.c.h.b16 %v314
    %v1000 = vunpack.c.l.b16 %v315
    %v1001 = vpack.c.b16 %v620, %v617
    %v1002 = vpack.c.b16 %v621, %v618
    %v1003 = vpack.c.b16 %v622, %v619
    %v1004 = vpack.c.b16 %v626, %v623
    %v1005 = vpack.c.b16 %v627, %v624
    %v1006 = vpack.c.b16 %v628, %v625
    %v1007 = vpack.c.b16 %v632, %v629
    %v1008 = vpack.c.b16 %v633, %v630
    %v1009 = vpack.c.b16 %v634, %v631
    %v1010 = vpack.c.b16 %v638, %v635
    %v1011 = vpack.c.b16 %v639, %v636
    %v1012 = vpack.c.b16 %v640, %v637
    %v1013 = vpack.c.b16 %v644, %v641
    %v1014 = vpack.c.b16 %v645, %v642
    %v1015 = vpack.c.b16 %v646, %v643
    %v1016 = vpack.c.b16 %v650, %v647
    %v1017 = vpack.c.b16 %v651, %v648
    %v1018 = vpack.c.b16 %v652, %v649
    %v1019 = vpack.c.b16 %v656, %v653
    %v1020 = vpack.c.b16 %v657, %v654
    %v1021 = vpack.c.b16 %v658, %v655
    %v1022 = vpack.c.b16 %v662, %v659
    %v1023 = vpack.c.b16 %v663, %v660
    %v1024 = vpack.c.b16 %v664, %v661
    %v1025 = vpack.c.b16 %v668, %v665
    %v1026 = vpack.c.b16 %v669, %v666
    %v1027 = vpack.c.b16 %v670, %v667
    %v1028 = vpack.c.b16 %v674, %v671
    %v1029 = vpack.c.b16 %v675, %v672
    %v1030 = vpack.c.b16 %v676, %v673
    %v1031 = vpack.c.b16 %v680, %v677
    %v1032 = vpack.c.b16 %v681, %v678
    %v1033 = vpack.c.b16 %v682, %v679
    %v1034 = vpack.c.b16 %v686, %v683
    %v1035 = vpack.c.b16 %v687, %v684
    %v1036 = vpack.c.b16 %v688, %v685
    %v1037 = vpack.c.b16 %v692, %v689
    %v1038 = vpack.c.b16 %v693, %v690
    %v1039 = vpack.c.b16 %v694, %v691
    %v1040 = vpack.c.b16 %v698, %v695
    %v1041 = vpack.c.b16 %v699, %v696
    %v1042 = vpack.c.b16 %v700, %v697
    %v1043 = vpack.c.b16 %v704, %v701
    %v1044 = vpack.c.b16 %v705, %v702
    %v1045 = vpack.c.b16 %v706, %v703
    %v1046 = vpack.c.b16 %v710, %v707
    %v1047 = vpack.c.b16 %v711, %v708
    %v1048 = vpack.c.b16 %v712, %v709
    %v1049 = vpack.c.b16 %v716, %v713
    %v1050 = vpack.c.b16 %v717, %v714
    %v1051 = vpack.c.b16 %v718, %v715
    %v1052 = vpack.c.b16 %v722, %v719
    %v1053 = vpack.c.b16 %v723, %v720
    %v1054 = vpack.c.b16 %v724, %v721
    %v1055 = vpack.c.b16 %v728, %v725
    %v1056 = vpack.c.b16 %v729, %v726
    %v1057 = vpack.c.b16 %v730, %v727
    %v1058 = vpack.c.b16 %v734, %v731
    %v1059 = vpack.c.b16 %v735, %v732
    %v1060 = vpack.c.b16 %v736, %v733
    %v1061 = vpack.c.b16 %v740, %v737
    %v1062 = vpack.c.b16 %v741, %v738
    %v1063 = vpack.c.b16 %v742, %v739
    %v1064 = vpack.c.b16 %v746, %v743
    %v1065 = vpack.c.b16 %v747, %v744
    %v1066 = vpack.c.b16 %v748, %v745
    %v1067 = vpack.c.b16 %v752, %v749
    %v1068 = vpack.c.b16 %v753, %v750
    %v1069 = vpack.c.b16 %v754, %v751
    %v1070 = vpack.c.b16 %v758, %v755
    %v1071 = vpack.c.b16 %v759, %v756
    %v1072 = vpack.c.b16 %v760, %v757
    %v1073 = vpack.c.b16 %v764, %v761
    %v1074 = vpack.c.b16 %v765, %v762
    %v1075 = vpack.c.b16 %v766, %v763
    %v1076 = vpack.c.b16 %v770, %v767
    %v1077 = vpack.c.b16 %v771, %v768
    %v1078 = vpack.c.b16 %v772, %v769
    %v1079 = vpack.c.b16 %v776, %v773
    %v1080 = vpack.c.b16 %v777, %v774
    %v1081 = vpack.c.b16 %v778, %v775
    %v1082 = vpack.c.b16 %v782, %v779
    %v1083 = vpack.c.b16 %v783, %v780
    %v1084 = vpack.c.b16 %v784, %v781
    %v1085 = vpack.c.b16 %v788, %v785
    %v1086 = vpack.c.b16 %v789, %v786
    %v1087 = vpack.c.b16 %v790, %v787
    %v1088 = vpack.c.b16 %v794, %v791
    %v1089 = vpack.c.b16 %v795, %v792
    %v1090 = vpack.c.b16 %v796, %v793
    %v1091 = vpack.c.b16 %v800, %v797
    %v1092 = vpack.c.b16 %v801, %v798
    %v1093 = vpack.c.b16 %v802, %v799
    %v1094 = vpack.c.b16 %v806, %v803
    %v1095 = vpack.c.b16 %v807, %v804
    %v1096 = vpack.c.b16 %v808, %v805
    %v1097 = vpack.c.b16 %v812, %v809
    %v1098 = vpack.c.b16 %v813, %v810
    %v1099 = vpack.c.b16 %v814, %v811
    %v1100 = vpack.c.b16 %v818, %v815
    %v1101 = vpack.c.b16 %v819, %v816
    %v1102 = vpack.c.b16 %v820, %v817
    %v1103 = vpack.c.b16 %v824, %v821
    %v1104 = vpack.c.b16 %v825, %v822
    %v1105 = vpack.c.b16 %v826, %v823
    %v1106 = vpack.c.b16 %v830, %v827
    %v1107 = vpack.c.b16 %v831, %v828
    %v1108 = vpack.c.b16 %v832, %v829
    %v1109 = vpack.c.b16 %v836, %v833
    %v1110 = vpack.c.b16 %v837, %v834
    %v1111 = vpack.c.b16 %v838, %v835
    %v1112 = vpack.c.b16 %v842, %v839
    %v1113 = vpack.c.b16 %v843, %v840
    %v1114 = vpack.c.b16 %v844, %v841
    %v1115 = vpack.c.b16 %v848, %v845
    %v1116 = vpack.c.b16 %v849, %v846
    %v1117 = vpack.c.b16 %v850, %v847
    %v1118 = vpack.c.b16 %v854, %v851
    %v1119 = vpack.c.b16 %v855, %v852
    %v1120 = vpack.c.b16 %v856, %v853
    %v1121 = vpack.c.b16 %v860, %v857
    %v1122 = vpack.c.b16 %v861, %v858
    %v1123 = vpack.c.b16 %v862, %v859
    %v1124 = vpack.c.b16 %v866, %v863
    %v1125 = vpack.c.b16 %v867, %v864
    %v1126 = vpack.c.b16 %v868, %v865
    %v1127 = vpack.c.b16 %v872, %v869
    %v1128 = vpack.c.b16 %v873, %v870
    %v1129 = vpack.c.b16 %v874, %v871
    %v1130 = vpack.c.b16 %v878, %v875
    %v1131 = vpack.c.b16 %v879, %v876
    %v1132 = vpack.c.b16 %v880, %v877
    %v1133 = vpack.c.b16 %v884, %v881
    %v1134 = vpack.c.b16 %v885, %v882
    %v1135 = vpack.c.b16 %v886, %v883
    %v1136 = vpack.c.b16 %v890, %v887
    %v1137 = vpack.c.b16 %v891, %v888
    %v1138 = vpack.c.b16 %v892, %v889
    %v1139 = vpack.c.b16 %v896, %v893
    %v1140 = vpack.c.b16 %v897, %v894
    %v1141 = vpack.c.b16 %v898, %v895
    %v1142 = vpack.c.b16 %v902, %v899
    %v1143 = vpack.c.b16 %v903, %v900
    %v1144 = vpack.c.b16 %v904, %v901
    %v1145 = vpack.c.b16 %v908, %v905
    %v1146 = vpack.c.b16 %v909, %v906
    %v1147 = vpack.c.b16 %v910, %v907
    %v1148 = vpack.c.b16 %v914, %v911
    %v1149 = vpack.c.b16 %v915, %v912
    %v1150 = vpack.c.b16 %v916, %v913
    %v1151 = vpack.c.b16 %v920, %v917
    %v1152 = vpack.c.b16 %v921, %v918
    %v1153 = vpack.c.b16 %v922, %v919
    %v1154 = vpack.c.b16 %v926, %v923
    %v1155 = vpack.c.b16 %v927, %v924
    %v1156 = vpack.c.b16 %v928, %v925
    %v1157 = vpack.c.b16 %v932, %v929
    %v1158 = vpack.c.b16 %v933, %v930
    %v1159 = vpack.c.b16 %v934, %v931
    %v1160 = vpack.c.b16 %v938, %v935
    %v1161 = vpack.c.b16 %v939, %v936
    %v1162 = vpack.c.b16 %v940, %v937
    %v1163 = vpack.c.b16 %v944, %v941
    %v1164 = vpack.c.b16 %v945, %v942
    %v1165 = vpack.c.b16 %v946, %v943
    %v1166 = vpack.c.b16 %v950, %v947
    %v1167 = vpack.c.b16 %v951, %v948
    %v1168 = vpack.c.b16 %v952, %v949
    %v1169 = vpack.c.b16 %v956, %v953
    %v1170 = vpack.c.b16 %v957, %v954
    %v1171 = vpack.c.b16 %v958, %v955
    %v1172 = vpack.c.b16 %v962, %v959
    %v1173 = vpack.c.b16 %v963, %v960
    %v1174 = vpack.c.b16 %v964, %v961
    %v1175 = vpack.c.b16 %v968, %v965
    %v1176 = vpack.c.b16 %v969, %v966
    %v1177 = vpack.c.b16 %v970, %v967
    %v1178 = vpack.c.b16 %v974, %v971
    %v1179 = vpack.c.b16 %v975, %v972
    %v1180 = vpack.c.b16 %v976, %v973
    %v1181 = vpack.c.b16 %v980, %v977
    %v1182 = vpack.c.b16 %v981, %v978
    %v1183 = vpack.c.b16 %v982, %v979
    %v1184 = vpack.c.b16 %v986, %v983
    %v1185 = vpack.c.b16 %v987, %v984
    %v1186 = vpack.c.b16 %v988, %v985
    %v1187 = vpack.c.b16 %v992, %v989
    %v1188 = vpack.c.b16 %v993, %v990
    %v1189 = vpack.c.b16 %v994, %v991
    %v1190 = vpack.c.b16 %v998, %v995
    %v1191 = vpack.c.b16 %v999, %v996
    %v1192 = vpack.c.b16 %v1000, %v997
    %1385 = vmatprep.subr.bf16.mxu0 %v1002
    %1386 = vmatpush1.bf16.msra.mxu0 %v1001
    %1387 = vmatprep.subr.bf16.mxu0 %v1005
    %1388 = vmatpush1.bf16.msra.mxu0 %v1004
    %1389 = vmatprep.subr.bf16.mxu0 %v1008
    %1390 = vmatpush1.bf16.msra.mxu0 %v1007
    %1391 = vmatprep.subr.bf16.mxu0 %v1011
    %1392 = vmatpush1.bf16.msra.mxu0 %v1010
    %1393 = vmatprep.subr.bf16.mxu0 %v1014
    %1394 = vmatpush1.bf16.msra.mxu0 %v1013
    %1395 = vmatprep.subr.bf16.mxu0 %v1017
    %1396 = vmatpush1.bf16.msra.mxu0 %v1016
    %1397 = vmatprep.subr.bf16.mxu0 %v1020
    %1398 = vmatpush1.bf16.msra.mxu0 %v1019
    %1399 = vmatprep.subr.bf16.mxu0 %v1023
    %1400 = vmatpush1.bf16.msra.mxu0 %v1022
    %1401 = vmatprep.subr.bf16.mxu0 %v1026
    %1402 = vmatpush1.bf16.msra.mxu0 %v1025
    %1403 = vmatprep.subr.bf16.mxu0 %v1029
    %1404 = vmatpush1.bf16.msra.mxu0 %v1028
    %1405 = vmatprep.subr.bf16.mxu0 %v1032
    %1406 = vmatpush1.bf16.msra.mxu0 %v1031
    %1407 = vmatprep.subr.bf16.mxu0 %v1035
    %1408 = vmatpush1.bf16.msra.mxu0 %v1034
    %1409 = vmatprep.subr.bf16.mxu0 %v1038
    %1410 = vmatpush1.bf16.msra.mxu0 %v1037
    %1411 = vmatprep.subr.bf16.mxu0 %v1041
    %1412 = vmatpush1.bf16.msra.mxu0 %v1040
    %1413 = vmatprep.subr.bf16.mxu0 %v1044
    %1414 = vmatpush1.bf16.msra.mxu0 %v1043
    %1415 = vmatprep.subr.bf16.mxu0 %v1047
    %1416 = vmatpush1.bf16.msra.mxu0 %v1046
    %1417 = vmatprep.mubr.bf16.mxu0 %v346
    %1418 = vmatmul.mubr.bf16.gmra.mrb[0].mxu0 %v345
    %v1419 = vpop.f32.mrb[0].mxu0
    %v1420 = vadd.f32 %v321, %v1419
    %v1421 = vpop.f32.mrb[0].mxu0
    %v1422 = vadd.f32 %v325, %v1421
    %v1423 = vpop.f32.mrb[0].mxu0
    %v1424 = vpop.f32.mrb[0].mxu0
    %1425 = vdwg.mxu0
    %1426 = vmatprep.subr.bf16.mxu0 %v1050
    %1427 = vmatpush1.bf16.msra.mxu0 %v1049
    %1428 = vmatprep.subr.bf16.mxu0 %v1053
    %1429 = vmatpush1.bf16.msra.mxu0 %v1052
    %1430 = vmatprep.subr.bf16.mxu0 %v1056
    %1431 = vmatpush1.bf16.msra.mxu0 %v1055
    %1432 = vmatprep.subr.bf16.mxu0 %v1059
    %1433 = vmatpush1.bf16.msra.mxu0 %v1058
    %1434 = vmatprep.subr.bf16.mxu0 %v1062
    %1435 = vmatpush1.bf16.msra.mxu0 %v1061
    %1436 = vmatprep.subr.bf16.mxu0 %v1065
    %1437 = vmatpush1.bf16.msra.mxu0 %v1064
    %1438 = vmatprep.subr.bf16.mxu0 %v1068
    %1439 = vmatpush1.bf16.msra.mxu0 %v1067
    %1440 = vmatprep.subr.bf16.mxu0 %v1071
    %1441 = vmatpush1.bf16.msra.mxu0 %v1070
    %1442 = vmatprep.subr.bf16.mxu0 %v1074
    %1443 = vmatpush1.bf16.msra.mxu0 %v1073
    %1444 = vmatprep.subr.bf16.mxu0 %v1077
    %1445 = vmatpush1.bf16.msra.mxu0 %v1076
    %1446 = vmatprep.subr.bf16.mxu0 %v1080
    %1447 = vmatpush1.bf16.msra.mxu0 %v1079
    %1448 = vmatprep.subr.bf16.mxu0 %v1083
    %1449 = vmatpush1.bf16.msra.mxu0 %v1082
    %1450 = vmatprep.subr.bf16.mxu0 %v1086
    %1451 = vmatpush1.bf16.msra.mxu0 %v1085
    %1452 = vmatprep.subr.bf16.mxu0 %v1089
    %1453 = vmatpush1.bf16.msra.mxu0 %v1088
    %1454 = vmatprep.subr.bf16.mxu0 %v1092
    %1455 = vmatpush1.bf16.msra.mxu0 %v1091
    %1456 = vmatprep.subr.bf16.mxu0 %v1095
    %1457 = vmatpush1.bf16.msra.mxu0 %v1094
    %1458 = vmatprep.mubr.bf16.mxu0 %v348
    %1459 = vmatmul.mubr.bf16.gmra.mrb[0].mxu0 %v347
    %v1460 = vpop.f32.mrb[0].mxu0
    %v1461 = vadd.f32 %v1420, %v1460
    %v1462 = vpop.f32.mrb[0].mxu0
    %v1463 = vadd.f32 %v1422, %v1462
    %v1464 = vpop.f32.mrb[0].mxu0
    %v1465 = vpop.f32.mrb[0].mxu0
    %1466 = vdwg.mxu0
    %1467 = vmatprep.subr.bf16.mxu0 %v1098
    %1468 = vmatpush1.bf16.msra.mxu0 %v1097
    %1469 = vmatprep.subr.bf16.mxu0 %v1101
    %1470 = vmatpush1.bf16.msra.mxu0 %v1100
    %1471 = vmatprep.subr.bf16.mxu0 %v1104
    %1472 = vmatpush1.bf16.msra.mxu0 %v1103
    %1473 = vmatprep.subr.bf16.mxu0 %v1107
    %1474 = vmatpush1.bf16.msra.mxu0 %v1106
    %1475 = vmatprep.subr.bf16.mxu0 %v1110
    %1476 = vmatpush1.bf16.msra.mxu0 %v1109
    %1477 = vmatprep.subr.bf16.mxu0 %v1113
    %1478 = vmatpush1.bf16.msra.mxu0 %v1112
    %1479 = vmatprep.subr.bf16.mxu0 %v1116
    %1480 = vmatpush1.bf16.msra.mxu0 %v1115
    %1481 = vmatprep.subr.bf16.mxu0 %v1119
    %1482 = vmatpush1.bf16.msra.mxu0 %v1118
    %1483 = vmatprep.subr.bf16.mxu0 %v1122
    %1484 = vmatpush1.bf16.msra.mxu0 %v1121
    %1485 = vmatprep.subr.bf16.mxu0 %v1125
    %1486 = vmatpush1.bf16.msra.mxu0 %v1124
    %1487 = vmatprep.subr.bf16.mxu0 %v1128
    %1488 = vmatpush1.bf16.msra.mxu0 %v1127
    %1489 = vmatprep.subr.bf16.mxu0 %v1131
    %1490 = vmatpush1.bf16.msra.mxu0 %v1130
    %1491 = vmatprep.subr.bf16.mxu0 %v1134
    %1492 = vmatpush1.bf16.msra.mxu0 %v1133
    %1493 = vmatprep.subr.bf16.mxu0 %v1137
    %1494 = vmatpush1.bf16.msra.mxu0 %v1136
    %1495 = vmatprep.subr.bf16.mxu0 %v1140
    %1496 = vmatpush1.bf16.msra.mxu0 %v1139
    %1497 = vmatprep.subr.bf16.mxu0 %v1143
    %1498 = vmatpush1.bf16.msra.mxu0 %v1142
    %1499 = vmatprep.mubr.bf16.mxu0 %v350
    %1500 = vmatmul.mubr.bf16.gmra.mrb[0].mxu0 %v349
    %v1501 = vpop.f32.mrb[0].mxu0
    %v1502 = vadd.f32 %v1461, %v1501
    %v1503 = vpop.f32.mrb[0].mxu0
    %v1504 = vadd.f32 %v1463, %v1503
    %v1505 = vpop.f32.mrb[0].mxu0
    %v1506 = vpop.f32.mrb[0].mxu0
    %1507 = vdwg.mxu0
    %1508 = vmatprep.subr.bf16.mxu0 %v1146
    %1509 = vmatpush1.bf16.msra.mxu0 %v1145
    %1510 = vmatprep.subr.bf16.mxu0 %v1149
    %1511 = vmatpush1.bf16.msra.mxu0 %v1148
    %1512 = vmatprep.subr.bf16.mxu0 %v1152
    %1513 = vmatpush1.bf16.msra.mxu0 %v1151
    %1514 = vmatprep.subr.bf16.mxu0 %v1155
    %1515 = vmatpush1.bf16.msra.mxu0 %v1154
    %1516 = vmatprep.subr.bf16.mxu0 %v1158
    %1517 = vmatpush1.bf16.msra.mxu0 %v1157
    %1518 = vmatprep.subr.bf16.mxu0 %v1161
    %1519 = vmatpush1.bf16.msra.mxu0 %v1160
    %1520 = vmatprep.subr.bf16.mxu0 %v1164
    %1521 = vmatpush1.bf16.msra.mxu0 %v1163
    %1522 = vmatprep.subr.bf16.mxu0 %v1167
    %1523 = vmatpush1.bf16.msra.mxu0 %v1166
    %1524 = vmatprep.subr.bf16.mxu0 %v1170
    %1525 = vmatpush1.bf16.msra.mxu0 %v1169
    %1526 = vmatprep.subr.bf16.mxu0 %v1173
    %1527 = vmatpush1.bf16.msra.mxu0 %v1172
    %1528 = vmatprep.subr.bf16.mxu0 %v1176
    %1529 = vmatpush1.bf16.msra.mxu0 %v1175
    %1530 = vmatprep.subr.bf16.mxu0 %v1179
    %1531 = vmatpush1.bf16.msra.mxu0 %v1178
    %1532 = vmatprep.subr.bf16.mxu0 %v1182
    %1533 = vmatpush1.bf16.msra.mxu0 %v1181
    %1534 = vmatprep.subr.bf16.mxu0 %v1185
    %1535 = vmatpush1.bf16.msra.mxu0 %v1184
    %1536 = vmatprep.subr.bf16.mxu0 %v1188
    %1537 = vmatpush1.bf16.msra.mxu0 %v1187
    %1538 = vmatprep.subr.bf16.mxu0 %v1191
    %1539 = vmatpush1.bf16.msra.mxu0 %v1190
    %1540 = vmatprep.mubr.bf16.mxu0 %v352
    %1541 = vmatmul.mubr.bf16.gmra.mrb[0].mxu0 %v351
    %v1542 = vpop.f32.mrb[0].mxu0
    %v1543 = vadd.f32 %v1502, %v1542
    %v1544 = vpop.f32.mrb[0].mxu0
    %v1545 = vadd.f32 %v1504, %v1544
    %v1546 = vpop.f32.mrb[0].mxu0
    %v1547 = vpop.f32.mrb[0].mxu0
    %1548 = vdwg.mxu0
    %1549 = vmatprep.subr.bf16.mxu0 0
    %1550 = vmatpush1.bf16.msra.mxu0 %v1003
    %1551 = vmatprep.subr.bf16.mxu0 0
    %1552 = vmatpush1.bf16.msra.mxu0 %v1006
    %1553 = vmatprep.subr.bf16.mxu0 0
    %1554 = vmatpush1.bf16.msra.mxu0 %v1009
    %1555 = vmatprep.subr.bf16.mxu0 0
    %1556 = vmatpush1.bf16.msra.mxu0 %v1012
    %1557 = vmatprep.subr.bf16.mxu0 0
    %1558 = vmatpush1.bf16.msra.mxu0 %v1015
    %1559 = vmatprep.subr.bf16.mxu0 0
    %1560 = vmatpush1.bf16.msra.mxu0 %v1018
    %1561 = vmatprep.subr.bf16.mxu0 0
    %1562 = vmatpush1.bf16.msra.mxu0 %v1021
    %1563 = vmatprep.subr.bf16.mxu0 0
    %1564 = vmatpush1.bf16.msra.mxu0 %v1024
    %1565 = vmatprep.subr.bf16.mxu0 0
    %1566 = vmatpush1.bf16.msra.mxu0 %v1027
    %1567 = vmatprep.subr.bf16.mxu0 0
    %1568 = vmatpush1.bf16.msra.mxu0 %v1030
    %1569 = vmatprep.subr.bf16.mxu0 0
    %1570 = vmatpush1.bf16.msra.mxu0 %v1033
    %1571 = vmatprep.subr.bf16.mxu0 0
    %1572 = vmatpush1.bf16.msra.mxu0 %v1036
    %1573 = vmatprep.subr.bf16.mxu0 0
    %1574 = vmatpush1.bf16.msra.mxu0 %v1039
    %1575 = vmatprep.subr.bf16.mxu0 0
    %1576 = vmatpush1.bf16.msra.mxu0 %v1042
    %1577 = vmatprep.subr.bf16.mxu0 0
    %1578 = vmatpush1.bf16.msra.mxu0 %v1045
    %1579 = vmatprep.subr.bf16.mxu0 0
    %1580 = vmatpush1.bf16.msra.mxu0 %v1048
    %1581 = vmatprep.mubr.bf16.mxu0 %v346
    %1582 = vmatmul.mubr.bf16.gmra.mrb[0].mxu0 %v345
    %v1583 = vpop.f32.mrb[0].mxu0
    %v1584 = vadd.f32 %v329, %v1583
    %v1585 = vpop.f32.mrb[0].mxu0
    %v1586 = vpop.f32.mrb[0].mxu0
    %v1587 = vpop.f32.mrb[0].mxu0
    %1588 = vdwg.mxu0
    %1589 = vmatprep.subr.bf16.mxu0 0
    %1590 = vmatpush1.bf16.msra.mxu0 %v1051
    %1591 = vmatprep.subr.bf16.mxu0 0
    %1592 = vmatpush1.bf16.msra.mxu0 %v1054
    %1593 = vmatprep.subr.bf16.mxu0 0
    %1594 = vmatpush1.bf16.msra.mxu0 %v1057
    %1595 = vmatprep.subr.bf16.mxu0 0
    %1596 = vmatpush1.bf16.msra.mxu0 %v1060
    %1597 = vmatprep.subr.bf16.mxu0 0
    %1598 = vmatpush1.bf16.msra.mxu0 %v1063
    %1599 = vmatprep.subr.bf16.mxu0 0
    %1600 = vmatpush1.bf16.msra.mxu0 %v1066
    %1601 = vmatprep.subr.bf16.mxu0 0
    %1602 = vmatpush1.bf16.msra.mxu0 %v1069
    %1603 = vmatprep.subr.bf16.mxu0 0
    %1604 = vmatpush1.bf16.msra.mxu0 %v1072
    %1605 = vmatprep.subr.bf16.mxu0 0
    %1606 = vmatpush1.bf16.msra.mxu0 %v1075
    %1607 = vmatprep.subr.bf16.mxu0 0
    %1608 = vmatpush1.bf16.msra.mxu0 %v1078
    %1609 = vmatprep.subr.bf16.mxu0 0
    %1610 = vmatpush1.bf16.msra.mxu0 %v1081
    %1611 = vmatprep.subr.bf16.mxu0 0
    %1612 = vmatpush1.bf16.msra.mxu0 %v1084
    %1613 = vmatprep.subr.bf16.mxu0 0
    %1614 = vmatpush1.bf16.msra.mxu0 %v1087
    %1615 = vmatprep.subr.bf16.mxu0 0
    %1616 = vmatpush1.bf16.msra.mxu0 %v1090
    %1617 = vmatprep.subr.bf16.mxu0 0
    %1618 = vmatpush1.bf16.msra.mxu0 %v1093
    %1619 = vmatprep.subr.bf16.mxu0 0
    %1620 = vmatpush1.bf16.msra.mxu0 %v1096
    %1621 = vmatprep.mubr.bf16.mxu0 %v348
    %1622 = vmatmul.mubr.bf16.gmra.mrb[0].mxu0 %v347
    %v1623 = vpop.f32.mrb[0].mxu0
    %v1624 = vadd.f32 %v1584, %v1623
    %v1625 = vpop.f32.mrb[0].mxu0
    %v1626 = vpop.f32.mrb[0].mxu0
    %v1627 = vpop.f32.mrb[0].mxu0
    %1628 = vdwg.mxu0
    %1629 = vmatprep.subr.bf16.mxu0 0
    %1630 = vmatpush1.bf16.msra.mxu0 %v1099
    %1631 = vmatprep.subr.bf16.mxu0 0
    %1632 = vmatpush1.bf16.msra.mxu0 %v1102
    %1633 = vmatprep.subr.bf16.mxu0 0
    %1634 = vmatpush1.bf16.msra.mxu0 %v1105
    %1635 = vmatprep.subr.bf16.mxu0 0
    %1636 = vmatpush1.bf16.msra.mxu0 %v1108
    %1637 = vmatprep.subr.bf16.mxu0 0
    %1638 = vmatpush1.bf16.msra.mxu0 %v1111
    %1639 = vmatprep.subr.bf16.mxu0 0
    %1640 = vmatpush1.bf16.msra.mxu0 %v1114
    %1641 = vmatprep.subr.bf16.mxu0 0
    %1642 = vmatpush1.bf16.msra.mxu0 %v1117
    %1643 = vmatprep.subr.bf16.mxu0 0
    %1644 = vmatpush1.bf16.msra.mxu0 %v1120
    %1645 = vmatprep.subr.bf16.mxu0 0
    %1646 = vmatpush1.bf16.msra.mxu0 %v1123
    %1647 = vmatprep.subr.bf16.mxu0 0
    %1648 = vmatpush1.bf16.msra.mxu0 %v1126
    %1649 = vmatprep.subr.bf16.mxu0 0
    %1650 = vmatpush1.bf16.msra.mxu0 %v1129
    %1651 = vmatprep.subr.bf16.mxu0 0
    %1652 = vmatpush1.bf16.msra.mxu0 %v1132
    %1653 = vmatprep.subr.bf16.mxu0 0
    %1654 = vmatpush1.bf16.msra.mxu0 %v1135
    %1655 = vmatprep.subr.bf16.mxu0 0
    %1656 = vmatpush1.bf16.msra.mxu0 %v1138
    %1657 = vmatprep.subr.bf16.mxu0 0
    %1658 = vmatpush1.bf16.msra.mxu0 %v1141
    %1659 = vmatprep.subr.bf16.mxu0 0
    %1660 = vmatpush1.bf16.msra.mxu0 %v1144
    %1661 = vmatprep.mubr.bf16.mxu0 %v350
    %1662 = vmatmul.mubr.bf16.gmra.mrb[0].mxu0 %v349
    %v1663 = vpop.f32.mrb[0].mxu0
    %v1664 = vadd.f32 %v1624, %v1663
    %v1665 = vpop.f32.mrb[0].mxu0
    %v1666 = vpop.f32.mrb[0].mxu0
    %v1667 = vpop.f32.mrb[0].mxu0
    %1668 = vdwg.mxu0
    %1669 = vmatprep.subr.bf16.mxu0 0
    %1670 = vmatpush1.bf16.msra.mxu0 %v1147
    %1671 = vmatprep.subr.bf16.mxu0 0
    %1672 = vmatpush1.bf16.msra.mxu0 %v1150
    %1673 = vmatprep.subr.bf16.mxu0 0
    %1674 = vmatpush1.bf16.msra.mxu0 %v1153
    %1675 = vmatprep.subr.bf16.mxu0 0
    %1676 = vmatpush1.bf16.msra.mxu0 %v1156
    %1677 = vmatprep.subr.bf16.mxu0 0
    %1678 = vmatpush1.bf16.msra.mxu0 %v1159
    %1679 = vmatprep.subr.bf16.mxu0 0
    %1680 = vmatpush1.bf16.msra.mxu0 %v1162
    %1681 = vmatprep.subr.bf16.mxu0 0
    %1682 = vmatpush1.bf16.msra.mxu0 %v1165
    %1683 = vmatprep.subr.bf16.mxu0 0
    %1684 = vmatpush1.bf16.msra.mxu0 %v1168
    %1685 = vmatprep.subr.bf16.mxu0 0
    %1686 = vmatpush1.bf16.msra.mxu0 %v1171
    %1687 = vmatprep.subr.bf16.mxu0 0
    %1688 = vmatpush1.bf16.msra.mxu0 %v1174
    %1689 = vmatprep.subr.bf16.mxu0 0
    %1690 = vmatpush1.bf16.msra.mxu0 %v1177
    %1691 = vmatprep.subr.bf16.mxu0 0
    %1692 = vmatpush1.bf16.msra.mxu0 %v1180
    %1693 = vmatprep.subr.bf16.mxu0 0
    %1694 = vmatpush1.bf16.msra.mxu0 %v1183
    %1695 = vmatprep.subr.bf16.mxu0 0
    %1696 = vmatpush1.bf16.msra.mxu0 %v1186
    %1697 = vmatprep.subr.bf16.mxu0 0
    %1698 = vmatpush1.bf16.msra.mxu0 %v1189
    %1699 = vmatprep.subr.bf16.mxu0 0
    %1700 = vmatpush1.bf16.msra.mxu0 %v1192
    %1701 = vmatprep.mubr.bf16.mxu0 %v352
    %1702 = vmatmul.mubr.bf16.gmra.mrb[0].mxu0 %v351
    %v1703 = vpop.f32.mrb[0].mxu0
    %v1704 = vadd.f32 %v1664, %v1703
    %v1705 = vpop.f32.mrb[0].mxu0
    %v1706 = vpop.f32.mrb[0].mxu0
    %v1707 = vpop.f32.mrb[0].mxu0
    %1708 = vdwg.mxu0
    %v1709 = vxor.u32 %v1543, 2147483648
    %v1710 = vxor.u32 %v1545, 2147483648
    %v1711 = vxor.u32 %v1704, 2147483648
    %v1712 = vmul.f32 %v1709, 1.442695
    %v1713 = vpow.pop %v1712
    %v1714 = vmul.f32 %v1710, 1.442695
    %v1715 = vpow.pop %v1714
    %v1716 = vmul.f32 %v1711, 1.442695
    %v1717 = vpow.pop %v1716
    %v1718 = vadd.f32 %v1713, 1.0
    %v1719 = vadd.f32 %v1715, 1.0
    %v1720 = vadd.f32 %v1717, 1.0
    %v1721 = vrcp.pop %v1718
    %v1722 = vmul.f32 1.0, %v1721
    %v1723 = vrcp.pop %v1719
    %v1724 = vmul.f32 1.0, %v1723
    %v1725 = vrcp.pop %v1720
    %v1726 = vmul.f32 1.0, %v1725
    %v1727 = vpack.c.bf16 %v1722, %v1722
    %v1728 = vpack.c.bf16 %v1724, %v1724
    %v1729 = vpack.c.bf16 %v1726, %v1726
    %v1730 = vld [vmem:[#allocation5] sm:$0xff]
    %v1731 = vld [vmem:[#allocation5 + $0x8] sm:$0xf]
    %v1732 = vld [vmem:[#allocation5 + $0xc] sm:$0xff]
    %v1733 = vld [vmem:[#allocation5 + $0x14] sm:$0xf]
    %v1734 = vld [vmem:[#allocation5 + $0x18] sm:$0xff]
    %v1735 = vld [vmem:[#allocation5 + $0x20] sm:$0xf]
    %v1736 = vld [vmem:[#allocation5 + $0x24] sm:$0xff]
    %v1737 = vld [vmem:[#allocation5 + $0x2c] sm:$0xf]
    %v1738 = vld [vmem:[#allocation5 + $0x30] sm:$0xff]
    %v1739 = vld [vmem:[#allocation5 + $0x38] sm:$0xf]
    %v1740 = vld [vmem:[#allocation5 + $0x3c] sm:$0xff]
    %v1741 = vld [vmem:[#allocation5 + $0x44] sm:$0xf]
    %v1742 = vld [vmem:[#allocation5 + $0x48] sm:$0xff]
    %v1743 = vld [vmem:[#allocation5 + $0x50] sm:$0xf]
    %v1744 = vld [vmem:[#allocation5 + $0x54] sm:$0xff]
    %v1745 = vld [vmem:[#allocation5 + $0x5c] sm:$0xf]
    %v1746 = vld [vmem:[#allocation5 + $0x60] sm:$0xff]
    %v1747 = vld [vmem:[#allocation5 + $0x68] sm:$0xf]
    %v1748 = vld [vmem:[#allocation5 + $0x6c] sm:$0xff]
    %v1749 = vld [vmem:[#allocation5 + $0x74] sm:$0xf]
    %v1750 = vld [vmem:[#allocation5 + $0x78] sm:$0xff]
    %v1751 = vld [vmem:[#allocation5 + $0x80] sm:$0xf]
    %v1752 = vld [vmem:[#allocation5 + $0x84] sm:$0xff]
    %v1753 = vld [vmem:[#allocation5 + $0x8c] sm:$0xf]
    %v1754 = vld [vmem:[#allocation5 + $0x90] sm:$0xff]
    %v1755 = vld [vmem:[#allocation5 + $0x98] sm:$0xf]
    %v1756 = vld [vmem:[#allocation5 + $0x9c] sm:$0xff]
    %v1757 = vld [vmem:[#allocation5 + $0xa4] sm:$0xf]
    %v1758 = vld [vmem:[#allocation5 + $0xa8] sm:$0xff]
    %v1759 = vld [vmem:[#allocation5 + $0xb0] sm:$0xf]
    %v1760 = vld [vmem:[#allocation5 + $0xb4] sm:$0xff]
    %v1761 = vld [vmem:[#allocation5 + $0xbc] sm:$0xf]
    %v1762 = vld [vmem:[#allocation5 + $0xc0] sm:$0xff]
    %v1763 = vld [vmem:[#allocation5 + $0xc8] sm:$0xf]
    %v1764 = vld [vmem:[#allocation5 + $0xcc] sm:$0xff]
    %v1765 = vld [vmem:[#allocation5 + $0xd4] sm:$0xf]
    %v1766 = vld [vmem:[#allocation5 + $0xd8] sm:$0xff]
    %v1767 = vld [vmem:[#allocation5 + $0xe0] sm:$0xf]
    %v1768 = vld [vmem:[#allocation5 + $0xe4] sm:$0xff]
    %v1769 = vld [vmem:[#allocation5 + $0xec] sm:$0xf]
    %v1770 = vld [vmem:[#allocation5 + $0xf0] sm:$0xff]
    %v1771 = vld [vmem:[#allocation5 + $0xf8] sm:$0xf]
    %v1772 = vld [vmem:[#allocation5 + $0xfc] sm:$0xff]
    %v1773 = vld [vmem:[#allocation5 + $0x104] sm:$0xf]
    %v1774 = vld [vmem:[#allocation5 + $0x108] sm:$0xff]
    %v1775 = vld [vmem:[#allocation5 + $0x110] sm:$0xf]
    %v1776 = vld [vmem:[#allocation5 + $0x114] sm:$0xff]
    %v1777 = vld [vmem:[#allocation5 + $0x11c] sm:$0xf]
    %v1778 = vld [vmem:[#allocation5 + $0x120] sm:$0xff]
    %v1779 = vld [vmem:[#allocation5 + $0x128] sm:$0xf]
    %v1780 = vld [vmem:[#allocation5 + $0x12c] sm:$0xff]
    %v1781 = vld [vmem:[#allocation5 + $0x134] sm:$0xf]
    %v1782 = vld [vmem:[#allocation5 + $0x138] sm:$0xff]
    %v1783 = vld [vmem:[#allocation5 + $0x140] sm:$0xf]
    %v1784 = vld [vmem:[#allocation5 + $0x144] sm:$0xff]
    %v1785 = vld [vmem:[#allocation5 + $0x14c] sm:$0xf]
    %v1786 = vld [vmem:[#allocation5 + $0x150] sm:$0xff]
    %v1787 = vld [vmem:[#allocation5 + $0x158] sm:$0xf]
    %v1788 = vld [vmem:[#allocation5 + $0x15c] sm:$0xff]
    %v1789 = vld [vmem:[#allocation5 + $0x164] sm:$0xf]
    %v1790 = vld [vmem:[#allocation5 + $0x168] sm:$0xff]
    %v1791 = vld [vmem:[#allocation5 + $0x170] sm:$0xf]
    %v1792 = vld [vmem:[#allocation5 + $0x174] sm:$0xff]
    %v1793 = vld [vmem:[#allocation5 + $0x17c] sm:$0xf]
    %v1794 = vld [vmem:[#allocation5 + $0x180] sm:$0xff]
    %v1795 = vld [vmem:[#allocation5 + $0x188] sm:$0xf]
    %v1796 = vld [vmem:[#allocation5 + $0x18c] sm:$0xff]
    %v1797 = vld [vmem:[#allocation5 + $0x194] sm:$0xf]
    %v1798 = vld [vmem:[#allocation5 + $0x198] sm:$0xff]
    %v1799 = vld [vmem:[#allocation5 + $0x1a0] sm:$0xf]
    %v1800 = vld [vmem:[#allocation5 + $0x1a4] sm:$0xff]
    %v1801 = vld [vmem:[#allocation5 + $0x1ac] sm:$0xf]
    %v1802 = vld [vmem:[#allocation5 + $0x1b0] sm:$0xff]
    %v1803 = vld [vmem:[#allocation5 + $0x1b8] sm:$0xf]
    %v1804 = vld [vmem:[#allocation5 + $0x1bc] sm:$0xff]
    %v1805 = vld [vmem:[#allocation5 + $0x1c4] sm:$0xf]
    %v1806 = vld [vmem:[#allocation5 + $0x1c8] sm:$0xff]
    %v1807 = vld [vmem:[#allocation5 + $0x1d0] sm:$0xf]
    %v1808 = vld [vmem:[#allocation5 + $0x1d4] sm:$0xff]
    %v1809 = vld [vmem:[#allocation5 + $0x1dc] sm:$0xf]
    %v1810 = vld [vmem:[#allocation5 + $0x1e0] sm:$0xff]
    %v1811 = vld [vmem:[#allocation5 + $0x1e8] sm:$0xf]
    %v1812 = vld [vmem:[#allocation5 + $0x1ec] sm:$0xff]
    %v1813 = vld [vmem:[#allocation5 + $0x1f4] sm:$0xf]
    %v1814 = vld [vmem:[#allocation5 + $0x1f8] sm:$0xff]
    %v1815 = vld [vmem:[#allocation5 + $0x200] sm:$0xf]
    %v1816 = vld [vmem:[#allocation5 + $0x204] sm:$0xff]
    %v1817 = vld [vmem:[#allocation5 + $0x20c] sm:$0xf]
    %v1818 = vld [vmem:[#allocation5 + $0x210] sm:$0xff]
    %v1819 = vld [vmem:[#allocation5 + $0x218] sm:$0xf]
    %v1820 = vld [vmem:[#allocation5 + $0x21c] sm:$0xff]
    %v1821 = vld [vmem:[#allocation5 + $0x224] sm:$0xf]
    %v1822 = vld [vmem:[#allocation5 + $0x228] sm:$0xff]
    %v1823 = vld [vmem:[#allocation5 + $0x230] sm:$0xf]
    %v1824 = vld [vmem:[#allocation5 + $0x234] sm:$0xff]
    %v1825 = vld [vmem:[#allocation5 + $0x23c] sm:$0xf]
    %v1826 = vld [vmem:[%s4] sm:$0x7]
    %v1828 = vlaneseq
    %v1829 = vshrl.u32 %v1828, 7
    %v1830 = vsub.s32 0, %v1829
    %v1831 = vrot.slane %v1826, %v1830
    %v1832 = vlaneseq
    %v1833 = vshrl.u32 %v1832, 7
    %v1834 = vsub.s32 1, %v1833
    %v1835 = vrot.slane %v1826, %v1834
    %v1836 = vlaneseq
    %v1837 = vshrl.u32 %v1836, 7
    %v1838 = vsub.s32 2, %v1837
    %v1839 = vrot.slane %v1826, %v1838
    %v1939 = vunpack.c.l.b16 %v1730
    %v1940 = vunpack.c.h.b16 %v1730
    %v1941 = vunpack.c.l.b16 %v1731
    %v1942 = vunpack.c.l.b16 %v1732
    %v1943 = vunpack.c.h.b16 %v1732
    %v1944 = vunpack.c.l.b16 %v1733
    %v1945 = vunpack.c.l.b16 %v1734
    %v1946 = vunpack.c.h.b16 %v1734
    %v1947 = vunpack.c.l.b16 %v1735
    %v1948 = vunpack.c.l.b16 %v1736
    %v1949 = vunpack.c.h.b16 %v1736
    %v1950 = vunpack.c.l.b16 %v1737
    %v1951 = vunpack.c.l.b16 %v1738
    %v1952 = vunpack.c.h.b16 %v1738
    %v1953 = vunpack.c.l.b16 %v1739
    %v1954 = vunpack.c.l.b16 %v1740
    %v1955 = vunpack.c.h.b16 %v1740
    %v1956 = vunpack.c.l.b16 %v1741
    %v1957 = vunpack.c.l.b16 %v1742
    %v1958 = vunpack.c.h.b16 %v1742
    %v1959 = vunpack.c.l.b16 %v1743
    %v1960 = vunpack.c.l.b16 %v1744
    %v1961 = vunpack.c.h.b16 %v1744
    %v1962 = vunpack.c.l.b16 %v1745
    %v1963 = vunpack.c.l.b16 %v1746
    %v1964 = vunpack.c.h.b16 %v1746
    %v1965 = vunpack.c.l.b16 %v1747
    %v1966 = vunpack.c.l.b16 %v1748
    %v1967 = vunpack.c.h.b16 %v1748
    %v1968 = vunpack.c.l.b16 %v1749
    %v1969 = vunpack.c.l.b16 %v1750
    %v1970 = vunpack.c.h.b16 %v1750
    %v1971 = vunpack.c.l.b16 %v1751
    %v1972 = vunpack.c.l.b16 %v1752
    %v1973 = vunpack.c.h.b16 %v1752
    %v1974 = vunpack.c.l.b16 %v1753
    %v1975 = vunpack.c.l.b16 %v1754
    %v1976 = vunpack.c.h.b16 %v1754
    %v1977 = vunpack.c.l.b16 %v1755
    %v1978 = vunpack.c.l.b16 %v1756
    %v1979 = vunpack.c.h.b16 %v1756
    %v1980 = vunpack.c.l.b16 %v1757
    %v1981 = vunpack.c.l.b16 %v1758
    %v1982 = vunpack.c.h.b16 %v1758
    %v1983 = vunpack.c.l.b16 %v1759
    %v1984 = vunpack.c.l.b16 %v1760
    %v1985 = vunpack.c.h.b16 %v1760
    %v1986 = vunpack.c.l.b16 %v1761
    %v1987 = vunpack.c.l.b16 %v1762
    %v1988 = vunpack.c.h.b16 %v1762
    %v1989 = vunpack.c.l.b16 %v1763
    %v1990 = vunpack.c.l.b16 %v1764
    %v1991 = vunpack.c.h.b16 %v1764
    %v1992 = vunpack.c.l.b16 %v1765
    %v1993 = vunpack.c.l.b16 %v1766
    %v1994 = vunpack.c.h.b16 %v1766
    %v1995 = vunpack.c.l.b16 %v1767
    %v1996 = vunpack.c.l.b16 %v1768
    %v1997 = vunpack.c.h.b16 %v1768
    %v1998 = vunpack.c.l.b16 %v1769
    %v1999 = vunpack.c.l.b16 %v1770
    %v2000 = vunpack.c.h.b16 %v1770
    %v2001 = vunpack.c.l.b16 %v1771
    %v2002 = vunpack.c.l.b16 %v1772
    %v2003 = vunpack.c.h.b16 %v1772
    %v2004 = vunpack.c.l.b16 %v1773
    %v2005 = vunpack.c.l.b16 %v1774
    %v2006 = vunpack.c.h.b16 %v1774
    %v2007 = vunpack.c.l.b16 %v1775
    %v2008 = vunpack.c.l.b16 %v1776
    %v2009 = vunpack.c.h.b16 %v1776
    %v2010 = vunpack.c.l.b16 %v1777
    %v2011 = vunpack.c.l.b16 %v1778
    %v2012 = vunpack.c.h.b16 %v1778
    %v2013 = vunpack.c.l.b16 %v1779
    %v2014 = vunpack.c.l.b16 %v1780
    %v2015 = vunpack.c.h.b16 %v1780
    %v2016 = vunpack.c.l.b16 %v1781
    %v2017 = vunpack.c.l.b16 %v1782
    %v2018 = vunpack.c.h.b16 %v1782
    %v2019 = vunpack.c.l.b16 %v1783
    %v2020 = vunpack.c.l.b16 %v1784
    %v2021 = vunpack.c.h.b16 %v1784
    %v2022 = vunpack.c.l.b16 %v1785
    %v2023 = vunpack.c.l.b16 %v1786
    %v2024 = vunpack.c.h.b16 %v1786
    %v2025 = vunpack.c.l.b16 %v1787
    %v2026 = vunpack.c.l.b16 %v1788
    %v2027 = vunpack.c.h.b16 %v1788
    %v2028 = vunpack.c.l.b16 %v1789
    %v2029 = vunpack.c.l.b16 %v1790
    %v2030 = vunpack.c.h.b16 %v1790
    %v2031 = vunpack.c.l.b16 %v1791
    %v2032 = vunpack.c.l.b16 %v1792
    %v2033 = vunpack.c.h.b16 %v1792
    %v2034 = vunpack.c.l.b16 %v1793
    %v2035 = vunpack.c.l.b16 %v1794
    %v2036 = vunpack.c.h.b16 %v1794
    %v2037 = vunpack.c.l.b16 %v1795
    %v2038 = vunpack.c.l.b16 %v1796
    %v2039 = vunpack.c.h.b16 %v1796
    %v2040 = vunpack.c.l.b16 %v1797
    %v2041 = vunpack.c.l.b16 %v1798
    %v2042 = vunpack.c.h.b16 %v1798
    %v2043 = vunpack.c.l.b16 %v1799
    %v2044 = vunpack.c.l.b16 %v1800
    %v2045 = vunpack.c.h.b16 %v1800
    %v2046 = vunpack.c.l.b16 %v1801
    %v2047 = vunpack.c.l.b16 %v1802
    %v2048 = vunpack.c.h.b16 %v1802
    %v2049 = vunpack.c.l.b16 %v1803
    %v2050 = vunpack.c.l.b16 %v1804
    %v2051 = vunpack.c.h.b16 %v1804
    %v2052 = vunpack.c.l.b16 %v1805
    %v2053 = vunpack.c.l.b16 %v1806
    %v2054 = vunpack.c.h.b16 %v1806
    %v2055 = vunpack.c.l.b16 %v1807
    %v2056 = vunpack.c.l.b16 %v1808
    %v2057 = vunpack.c.h.b16 %v1808
    %v2058 = vunpack.c.l.b16 %v1809
    %v2059 = vunpack.c.l.b16 %v1810
    %v2060 = vunpack.c.h.b16 %v1810
    %v2061 = vunpack.c.l.b16 %v1811
    %v2062 = vunpack.c.l.b16 %v1812
    %v2063 = vunpack.c.h.b16 %v1812
    %v2064 = vunpack.c.l.b16 %v1813
    %v2065 = vunpack.c.l.b16 %v1814
    %v2066 = vunpack.c.h.b16 %v1814
    %v2067 = vunpack.c.l.b16 %v1815
    %v2068 = vunpack.c.l.b16 %v1816
    %v2069 = vunpack.c.h.b16 %v1816
    %v2070 = vunpack.c.l.b16 %v1817
    %v2071 = vunpack.c.l.b16 %v1818
    %v2072 = vunpack.c.h.b16 %v1818
    %v2073 = vunpack.c.l.b16 %v1819
    %v2074 = vunpack.c.l.b16 %v1820
    %v2075 = vunpack.c.h.b16 %v1820
    %v2076 = vunpack.c.l.b16 %v1821
    %v2077 = vunpack.c.l.b16 %v1822
    %v2078 = vunpack.c.h.b16 %v1822
    %v2079 = vunpack.c.l.b16 %v1823
    %v2080 = vunpack.c.l.b16 %v1824
    %v2081 = vunpack.c.h.b16 %v1824
    %v2082 = vunpack.c.l.b16 %v1825
    %v2083 = vpack.c.b16 %v1942, %v1939
    %v2084 = vpack.c.b16 %v1943, %v1940
    %v2085 = vpack.c.b16 %v1944, %v1941
    %v2086 = vpack.c.b16 %v1948, %v1945
    %v2087 = vpack.c.b16 %v1949, %v1946
    %v2088 = vpack.c.b16 %v1950, %v1947
    %v2089 = vpack.c.b16 %v1954, %v1951
    %v2090 = vpack.c.b16 %v1955, %v1952
    %v2091 = vpack.c.b16 %v1956, %v1953
    %v2092 = vpack.c.b16 %v1960, %v1957
    %v2093 = vpack.c.b16 %v1961, %v1958
    %v2094 = vpack.c.b16 %v1962, %v1959
    %v2095 = vpack.c.b16 %v1966, %v1963
    %v2096 = vpack.c.b16 %v1967, %v1964
    %v2097 = vpack.c.b16 %v1968, %v1965
    %v2098 = vpack.c.b16 %v1972, %v1969
    %v2099 = vpack.c.b16 %v1973, %v1970
    %v2100 = vpack.c.b16 %v1974, %v1971
    %v2101 = vpack.c.b16 %v1978, %v1975
    %v2102 = vpack.c.b16 %v1979, %v1976
    %v2103 = vpack.c.b16 %v1980, %v1977
    %v2104 = vpack.c.b16 %v1984, %v1981
    %v2105 = vpack.c.b16 %v1985, %v1982
    %v2106 = vpack.c.b16 %v1986, %v1983
    %v2107 = vpack.c.b16 %v1990, %v1987
    %v2108 = vpack.c.b16 %v1991, %v1988
    %v2109 = vpack.c.b16 %v1992, %v1989
    %v2110 = vpack.c.b16 %v1996, %v1993
    %v2111 = vpack.c.b16 %v1997, %v1994
    %v2112 = vpack.c.b16 %v1998, %v1995
    %v2113 = vpack.c.b16 %v2002, %v1999
    %v2114 = vpack.c.b16 %v2003, %v2000
    %v2115 = vpack.c.b16 %v2004, %v2001
    %v2116 = vpack.c.b16 %v2008, %v2005
    %v2117 = vpack.c.b16 %v2009, %v2006
    %v2118 = vpack.c.b16 %v2010, %v2007
    %v2119 = vpack.c.b16 %v2014, %v2011
    %v2120 = vpack.c.b16 %v2015, %v2012
    %v2121 = vpack.c.b16 %v2016, %v2013
    %v2122 = vpack.c.b16 %v2020, %v2017
    %v2123 = vpack.c.b16 %v2021, %v2018
    %v2124 = vpack.c.b16 %v2022, %v2019
    %v2125 = vpack.c.b16 %v2026, %v2023
    %v2126 = vpack.c.b16 %v2027, %v2024
    %v2127 = vpack.c.b16 %v2028, %v2025
    %v2128 = vpack.c.b16 %v2032, %v2029
    %v2129 = vpack.c.b16 %v2033, %v2030
    %v2130 = vpack.c.b16 %v2034, %v2031
    %v2131 = vpack.c.b16 %v2038, %v2035
    %v2132 = vpack.c.b16 %v2039, %v2036
    %v2133 = vpack.c.b16 %v2040, %v2037
    %v2134 = vpack.c.b16 %v2044, %v2041
    %v2135 = vpack.c.b16 %v2045, %v2042
    %v2136 = vpack.c.b16 %v2046, %v2043
    %v2137 = vpack.c.b16 %v2050, %v2047
    %v2138 = vpack.c.b16 %v2051, %v2048
    %v2139 = vpack.c.b16 %v2052, %v2049
    %v2140 = vpack.c.b16 %v2056, %v2053
    %v2141 = vpack.c.b16 %v2057, %v2054
    %v2142 = vpack.c.b16 %v2058, %v2055
    %v2143 = vpack.c.b16 %v2062, %v2059
    %v2144 = vpack.c.b16 %v2063, %v2060
    %v2145 = vpack.c.b16 %v2064, %v2061
    %v2146 = vpack.c.b16 %v2068, %v2065
    %v2147 = vpack.c.b16 %v2069, %v2066
    %v2148 = vpack.c.b16 %v2070, %v2067
    %v2149 = vpack.c.b16 %v2074, %v2071
    %v2150 = vpack.c.b16 %v2075, %v2072
    %v2151 = vpack.c.b16 %v2076, %v2073
    %v2152 = vpack.c.b16 %v2080, %v2077
    %v2153 = vpack.c.b16 %v2081, %v2078
    %v2154 = vpack.c.b16 %v2082, %v2079
    %2227 = vmatprep.subr.bf16.mxu0 %v2084
    %2228 = vmatpush1.bf16.msra.mxu0 %v2083
    %2229 = vmatprep.subr.bf16.mxu0 %v2087
    %2230 = vmatpush1.bf16.msra.mxu0 %v2086
    %2231 = vmatprep.subr.bf16.mxu0 %v2090
    %2232 = vmatpush1.bf16.msra.mxu0 %v2089
    %2233 = vmatprep.subr.bf16.mxu0 %v2093
    %2234 = vmatpush1.bf16.msra.mxu0 %v2092
    %2235 = vmatprep.subr.bf16.mxu0 %v2096
    %2236 = vmatpush1.bf16.msra.mxu0 %v2095
    %2237 = vmatprep.subr.bf16.mxu0 %v2099
    %2238 = vmatpush1.bf16.msra.mxu0 %v2098
    %2239 = vmatprep.subr.bf16.mxu0 %v2102
    %2240 = vmatpush1.bf16.msra.mxu0 %v2101
    %2241 = vmatprep.subr.bf16.mxu0 %v2105
    %2242 = vmatpush1.bf16.msra.mxu0 %v2104
    %2243 = vmatprep.subr.bf16.mxu0 %v2108
    %2244 = vmatpush1.bf16.msra.mxu0 %v2107
    %2245 = vmatprep.subr.bf16.mxu0 %v2111
    %2246 = vmatpush1.bf16.msra.mxu0 %v2110
    %2247 = vmatprep.subr.bf16.mxu0 %v2114
    %2248 = vmatpush1.bf16.msra.mxu0 %v2113
    %2249 = vmatprep.subr.bf16.mxu0 %v2117
    %2250 = vmatpush1.bf16.msra.mxu0 %v2116
    %2251 = vmatprep.subr.bf16.mxu0 %v2120
    %2252 = vmatpush1.bf16.msra.mxu0 %v2119
    %2253 = vmatprep.subr.bf16.mxu0 %v2123
    %2254 = vmatpush1.bf16.msra.mxu0 %v2122
    %2255 = vmatprep.subr.bf16.mxu0 %v2126
    %2256 = vmatpush1.bf16.msra.mxu0 %v2125
    %2257 = vmatprep.subr.bf16.mxu0 %v2129
    %2258 = vmatpush1.bf16.msra.mxu0 %v2128
    %2259 = vmatprep.mubr.bf16.mxu0 %v1728
    %2260 = vmatmul.mubr.bf16.gmra.mrb[0].mxu0 %v1727
    %v2261 = vpop.f32.mrb[0].mxu0
    %v2262 = vadd.f32 %v1831, %v2261
    %v2263 = vpop.f32.mrb[0].mxu0
    %v2264 = vadd.f32 %v1835, %v2263
    %v2265 = vpop.f32.mrb[0].mxu0
    %v2266 = vpop.f32.mrb[0].mxu0
    %2267 = vdwg.mxu0
    %2268 = vmatprep.subr.bf16.mxu0 %v2132
    %2269 = vmatpush1.bf16.msra.mxu0 %v2131
    %2270 = vmatprep.subr.bf16.mxu0 %v2135
    %2271 = vmatpush1.bf16.msra.mxu0 %v2134
    %2272 = vmatprep.subr.bf16.mxu0 %v2138
    %2273 = vmatpush1.bf16.msra.mxu0 %v2137
    %2274 = vmatprep.subr.bf16.mxu0 %v2141
    %2275 = vmatpush1.bf16.msra.mxu0 %v2140
    %2276 = vmatprep.subr.bf16.mxu0 %v2144
    %2277 = vmatpush1.bf16.msra.mxu0 %v2143
    %2278 = vmatprep.subr.bf16.mxu0 %v2147
    %2279 = vmatpush1.bf16.msra.mxu0 %v2146
    %2280 = vmatprep.subr.bf16.mxu0 %v2150
    %2281 = vmatpush1.bf16.msra.mxu0 %v2149
    %2282 = vmatprep.subr.bf16.mxu0 %v2153
    %2283 = vmatpush1.bf16.msra.mxu0 %v2152
    %2284 = vmatprep.subr.bf16.mxu0 0
    %2285 = vmatpush1.bf16.msra.mxu0 0
    %2286 = vmatprep.subr.bf16.mxu0 0
    %2287 = vmatpush1.bf16.msra.mxu0 0
    %2288 = vmatprep.subr.bf16.mxu0 0
    %2289 = vmatpush1.bf16.msra.mxu0 0
    %2290 = vmatprep.subr.bf16.mxu0 0
    %2291 = vmatpush1.bf16.msra.mxu0 0
    %2292 = vmatprep.subr.bf16.mxu0 0
    %2293 = vmatpush1.bf16.msra.mxu0 0
    %2294 = vmatprep.subr.bf16.mxu0 0
    %2295 = vmatpush1.bf16.msra.mxu0 0
    %2296 = vmatprep.subr.bf16.mxu0 0
    %2297 = vmatpush1.bf16.msra.mxu0 0
    %2298 = vmatprep.subr.bf16.mxu0 0
    %2299 = vmatpush1.bf16.msra.mxu0 0
    %2300 = vmatprep.mubr.bf16.mxu0 0
    %2301 = vmatmul.mubr.bf16.gmra.mrb[0].mxu0 %v1729
    %v2302 = vpop.f32.mrb[0].mxu0
    %v2303 = vadd.f32 %v2262, %v2302
    %v2304 = vpop.f32.mrb[0].mxu0
    %v2305 = vadd.f32 %v2264, %v2304
    %v2306 = vpop.f32.mrb[0].mxu0
    %v2307 = vpop.f32.mrb[0].mxu0
    %2308 = vdwg.mxu0
    %2309 = vmatprep.subr.bf16.mxu0 0
    %2310 = vmatpush1.bf16.msra.mxu0 %v2085
    %2311 = vmatprep.subr.bf16.mxu0 0
    %2312 = vmatpush1.bf16.msra.mxu0 %v2088
    %2313 = vmatprep.subr.bf16.mxu0 0
    %2314 = vmatpush1.bf16.msra.mxu0 %v2091
    %2315 = vmatprep.subr.bf16.mxu0 0
    %2316 = vmatpush1.bf16.msra.mxu0 %v2094
    %2317 = vmatprep.subr.bf16.mxu0 0
    %2318 = vmatpush1.bf16.msra.mxu0 %v2097
    %2319 = vmatprep.subr.bf16.mxu0 0
    %2320 = vmatpush1.bf16.msra.mxu0 %v2100
    %2321 = vmatprep.subr.bf16.mxu0 0
    %2322 = vmatpush1.bf16.msra.mxu0 %v2103
    %2323 = vmatprep.subr.bf16.mxu0 0
    %2324 = vmatpush1.bf16.msra.mxu0 %v2106
    %2325 = vmatprep.subr.bf16.mxu0 0
    %2326 = vmatpush1.bf16.msra.mxu0 %v2109
    %2327 = vmatprep.subr.bf16.mxu0 0
    %2328 = vmatpush1.bf16.msra.mxu0 %v2112
    %2329 = vmatprep.subr.bf16.mxu0 0
    %2330 = vmatpush1.bf16.msra.mxu0 %v2115
    %2331 = vmatprep.subr.bf16.mxu0 0
    %2332 = vmatpush1.bf16.msra.mxu0 %v2118
    %2333 = vmatprep.subr.bf16.mxu0 0
    %2334 = vmatpush1.bf16.msra.mxu0 %v2121
    %2335 = vmatprep.subr.bf16.mxu0 0
    %2336 = vmatpush1.bf16.msra.mxu0 %v2124
    %2337 = vmatprep.subr.bf16.mxu0 0
    %2338 = vmatpush1.bf16.msra.mxu0 %v2127
    %2339 = vmatprep.subr.bf16.mxu0 0
    %2340 = vmatpush1.bf16.msra.mxu0 %v2130
    %2341 = vmatprep.mubr.bf16.mxu0 %v1728
    %2342 = vmatmul.mubr.bf16.gmra.mrb[0].mxu0 %v1727
    %v2343 = vpop.f32.mrb[0].mxu0
    %v2344 = vadd.f32 %v1839, %v2343
    %v2345 = vpop.f32.mrb[0].mxu0
    %v2346 = vpop.f32.mrb[0].mxu0
    %v2347 = vpop.f32.mrb[0].mxu0
    %2348 = vdwg.mxu0
    %2349 = vmatprep.subr.bf16.mxu0 0
    %2350 = vmatpush1.bf16.msra.mxu0 %v2133
    %2351 = vmatprep.subr.bf16.mxu0 0
    %2352 = vmatpush1.bf16.msra.mxu0 %v2136
    %2353 = vmatprep.subr.bf16.mxu0 0
    %2354 = vmatpush1.bf16.msra.mxu0 %v2139
    %2355 = vmatprep.subr.bf16.mxu0 0
    %2356 = vmatpush1.bf16.msra.mxu0 %v2142
    %2357 = vmatprep.subr.bf16.mxu0 0
    %2358 = vmatpush1.bf16.msra.mxu0 %v2145
    %2359 = vmatprep.subr.bf16.mxu0 0
    %2360 = vmatpush1.bf16.msra.mxu0 %v2148
    %2361 = vmatprep.subr.bf16.mxu0 0
    %2362 = vmatpush1.bf16.msra.mxu0 %v2151
    %2363 = vmatprep.subr.bf16.mxu0 0
    %2364 = vmatpush1.bf16.msra.mxu0 %v2154
    %2365 = vmatprep.subr.bf16.mxu0 0
    %2366 = vmatpush1.bf16.msra.mxu0 0
    %2367 = vmatprep.subr.bf16.mxu0 0
    %2368 = vmatpush1.bf16.msra.mxu0 0
    %2369 = vmatprep.subr.bf16.mxu0 0
    %2370 = vmatpush1.bf16.msra.mxu0 0
    %2371 = vmatprep.subr.bf16.mxu0 0
    %2372 = vmatpush1.bf16.msra.mxu0 0
    %2373 = vmatprep.subr.bf16.mxu0 0
    %2374 = vmatpush1.bf16.msra.mxu0 0
    %2375 = vmatprep.subr.bf16.mxu0 0
    %2376 = vmatpush1.bf16.msra.mxu0 0
    %2377 = vmatprep.subr.bf16.mxu0 0
    %2378 = vmatpush1.bf16.msra.mxu0 0
    %2379 = vmatprep.subr.bf16.mxu0 0
    %2380 = vmatpush1.bf16.msra.mxu0 0
    %2381 = vmatprep.mubr.bf16.mxu0 0
    %2382 = vmatmul.mubr.bf16.gmra.mrb[0].mxu0 %v1729
    %v2383 = vpop.f32.mrb[0].mxu0
    %v2384 = vadd.f32 %v2344, %v2383
    %v2385 = vpop.f32.mrb[0].mxu0
    %v2386 = vpop.f32.mrb[0].mxu0
    %v2387 = vpop.f32.mrb[0].mxu0
    %2388 = vdwg.mxu0
    %v2389 = vxor.u32 %v2303, 2147483648
    %v2390 = vxor.u32 %v2305, 2147483648
    %v2391 = vxor.u32 %v2384, 2147483648
    %v2392 = vmul.f32 %v2389, 1.442695
    %v2393 = vpow.pop %v2392
    %v2394 = vmul.f32 %v2390, 1.442695
    %v2395 = vpow.pop %v2394
    %v2396 = vmul.f32 %v2391, 1.442695
    %v2397 = vpow.pop %v2396
    %v2398 = vadd.f32 %v2393, 1.0
    %v2399 = vadd.f32 %v2395, 1.0
    %v2400 = vadd.f32 %v2397, 1.0
    %v2401 = vrcp.pop %v2398
    %v2402 = vmul.f32 1.0, %v2401
    %v2403 = vrcp.pop %v2399
    %v2404 = vmul.f32 1.0, %v2403
    %v2405 = vrcp.pop %v2400
    %v2406 = vmul.f32 1.0, %v2405
    %v2407 = vld [vmem:[%s5] sm:$0x7]
    %v2408 = vunpack.c.l.bf16 %v2407
    %v2410 = vlaneseq
    %v2411 = vshrl.u32 %v2410, 7
    %v2412 = vsub.s32 0, %v2411
    %v2413 = vrot.slane %v2408, %v2412
    %v2414 = vlaneseq
    %v2415 = vshrl.u32 %v2414, 7
    %v2416 = vsub.s32 2, %v2415
    %v2417 = vrot.slane %v2408, %v2416
    %v2418 = vlaneseq
    %v2419 = vshrl.u32 %v2418, 7
    %v2420 = vsub.s32 4, %v2419
    %v2421 = vrot.slane %v2408, %v2420
    %v2425 = vlaneseq
    %v2426 = vshrl.u32 %v2425, 7
    %v2427 = vsub.s32 0, %v2426
    %v2428 = vrot.slane %v2413, %v2427
    %v2429 = vlaneseq
    %v2430 = vshrl.u32 %v2429, 7
    %v2431 = vsub.s32 0, %v2430
    %v2432 = vrot.slane %v2417, %v2431
    %v2433 = vlaneseq
    %v2434 = vshrl.u32 %v2433, 7
    %v2435 = vsub.s32 0, %v2434
    %v2436 = vrot.slane %v2421, %v2435
    %v2437 = vmul.f32 %v2402, %v2428
    %v2438 = vmul.f32 %v2404, %v2432
    %v2439 = vmul.f32 %v2406, %v2436
    %v2440 = vadd.f32 %v2437, %v2438
    %v2441 = vadd.f32 %v2440, %v2439
    %2442 = vadd.xlane.f32.xlu0 %v2441
    %v2443 = vpop.xlane.xlu0 %2442
    %s2444 = sld [smem:[#allocation2]]
    %v2445 = vstv %s2444
    %v2446 = vadd.f32 %v2443, %v2445
    %v2447 = vxor.u32 %v2446, 2147483648
    %v2448 = vmul.f32 %v2447, 1.442695
    %v2449 = vpow.pop %v2448
    %v2450 = vadd.f32 %v2449, 1.0
    %v2451 = vrcp.pop %v2450
    %v2452 = vmul.f32 1.0, %v2451
    %vm2453 = vcmask 7168
    %2454 = vst.msk [vmem:[%s7] sm:$0xff] %vm2453, %v2452
    // Predicated region
    $region38: #{mlp_forward.1} parent=1 // pred_check
      _
    $region39: #{mlp_forward.1} parent=1 // pred_check_branch
      %2456 = sbr.rel (0) target = $region41
    $region40: #{mlp_forward.1} parent=1 // pred_region
      _
    $region41: #{mlp_forward.1} parent=1 // pred_fallthru
      _
    // Predicated region
    $region42: #{mlp_forward.1} parent=1 // pred_check
      _
    $region43: #{mlp_forward.1} parent=1 // pred_check_branch
      %2458 = sbr.rel (0) target = $region45
    $region44: #{mlp_forward.1} parent=1 // pred_region
      _
    $region45: #{mlp_forward.1} parent=1 // pred_fallthru
      _
    %2459 = vsyncpa [#allocation4], 1
    %2460 = vsyncpa [#allocation6], 1

</llo_original>
